<compile_context>
chip_gen: v6e
topology: v6e:2x2x1
jax: 0.10.0
libtpu: 0.0.40
codegen_flags: <defaults>
</compile_context>

<pallas_src>
import math
import functools

import jax
import jax.numpy as jnp
from jax.experimental import pallas as pl
from jax.experimental.pallas import tpu as pltpu


def _round_up(x, m):
    return (x + m - 1) // m * m


def _attention_kernel(q_ref, k_ref, v_ref, energy_ref, out_ref,
                      s_scr, m_scr, acc_scr,
                      *, scale, t_valid, t_tile, mask_t):
    """Grid = (num_b_blocks, num_t_blocks); axis 1 (T) is streamed/reduced.

    q_ref:      [tB, Qp]       resident across the T axis
    k_ref:      [tT, tB, Qp]   time-major K tile (streamed)
    v_ref:      [tT, tB, Vp]   time-major V tile (streamed)
    energy_ref: [tB, Tp]       resident output block (written on last T tile)
    out_ref:    [tB, Vp]       resident output block (written on last T tile)
    s_scr:      [tB, Tp]       raw scaled scores (for exact softmax finalize)
    m_scr:      [tB, 1]        running max
    acc_scr:    [tB, Vp]       running un-normalized output accumulator
    """
    ti = pl.program_id(1)
    n_t = pl.num_programs(1)

    @pl.when(ti == 0)
    def _init():
        m_scr[...] = jnp.full_like(m_scr, -jnp.inf)
        acc_scr[...] = jnp.zeros_like(acc_scr)

    qf = q_ref[...].astype(jnp.float32)                   # [tB, Qp]
    kf = k_ref[...].astype(jnp.float32)                   # [tT, tB, Qp]

    # scores[t, b] = scale * sum_d q[b, d] * k[t, b, d]
    # Single-query attention is a matvec: keep it on the VPU (broadcast-mult)
    # + XLU lane reduction instead of B degenerate 1-row MXU matmuls.
    s_tb = jnp.sum(qf[None, :, :] * kf, axis=-1) * scale  # [tT, tB]

    if mask_t:
        t0 = ti * t_tile
        t_idx = t0 + jax.lax.broadcasted_iota(jnp.int32, s_tb.shape, 0)
        s_tb = jnp.where(t_idx < t_valid, s_tb, -jnp.inf)

    # Stash the raw scores in lane-dense [b, t] layout for the exact softmax
    # at the end; the small transpose runs on the otherwise-idle XLU.
    s_bt = jnp.transpose(s_tb)                             # [tB, tT]
    col0 = pl.multiple_of(ti * t_tile, t_tile)
    s_scr[:, pl.ds(col0, t_tile)] = s_bt

    # Flash-style online accumulation of the un-normalized output.
    m_prev = m_scr[...]                                    # [tB, 1]
    m_new = jnp.maximum(m_prev, jnp.max(s_bt, axis=1, keepdims=True))
    alpha = jnp.exp(m_prev - m_new)                        # [tB, 1]
    p_tb = jnp.exp(s_tb - jnp.transpose(m_new))            # [tT, tB]

    vf = v_ref[...].astype(jnp.float32)                    # [tT, tB, Vp]
    # out[b, v] += sum_t p[t, b] * v[t, b, v]  (VPU multiply + vreg adds)
    contrib = jnp.sum(p_tb[:, :, None] * vf, axis=0)       # [tB, Vp]
    acc_scr[...] = acc_scr[...] * alpha + contrib
    m_scr[...] = m_new

    @pl.when(ti == n_t - 1)
    def _finalize():
        m_fin = m_scr[...]                                 # [tB, 1]
        p_all = jnp.exp(s_scr[...] - m_fin)                # [tB, Tp]
        l = jnp.sum(p_all, axis=1, keepdims=True)          # [tB, 1]
        inv_l = pl.reciprocal(l, approx=False)             # exact: matches softmax
        energy_ref[...] = (p_all * inv_l).astype(energy_ref.dtype)
        out_ref[...] = (acc_scr[...] * inv_l).astype(out_ref.dtype)


def attention(query, keys, values, *, block_b=None, block_t=None,
              interpret=False):
    """query: [B, Q], keys: [T, B, Q], values: [T, B, V] (PyTorch layout).

    Returns (energy [B, 1, T], linear_combination [B, V]).
    """
    B, Qd = query.shape
    T, Bk, Qk = keys.shape
    Tv, Bv, Vd = values.shape
    assert Bk == B and Bv == B and Tv == T and Qk == Qd

    scale = 1.0 / math.sqrt(Qd)
    out_dtype = query.dtype

    LANE, SUB = 128, 8
    Qp = _round_up(Qd, LANE)
    Vp = _round_up(Vd, LANE)

    tB = _round_up(block_b, SUB) if block_b else min(_round_up(B, SUB), 32)
    Bp = _round_up(B, tB)

    if block_t is None:
        # Size the streamed T tile so double-buffered K/V tiles plus the
        # element-wise intermediates stay well inside scoped VMEM (v7x-safe).
        per_t_bytes = tB * (Qp + Vp) * 4
        budget = 20 * 2**20
        tT = max(LANE, min(_round_up(T, LANE),
                           (budget // (4 * per_t_bytes)) // LANE * LANE,
                           1024))
    else:
        tT = _round_up(block_t, LANE)
    Tp = _round_up(T, tT)
    n_b, n_t = Bp // tB, Tp // tT

    # Pad only if not already aligned (no-op for aligned production shapes).
    # K/V are kept in their native time-major layout: no transpose copies.
    q_in = query
    if (Bp, Qp) != query.shape:
        q_in = jnp.pad(query, ((0, Bp - B), (0, Qp - Qd)))
    k_in = keys
    if (Tp, Bp, Qp) != keys.shape:
        k_in = jnp.pad(keys, ((0, Tp - T), (0, Bp - B), (0, Qp - Qd)))
    v_in = values
    if (Tp, Bp, Vp) != values.shape:
        v_in = jnp.pad(values, ((0, Tp - T), (0, Bp - B), (0, Vp - Vd)))

    kernel = functools.partial(
        _attention_kernel, scale=scale, t_valid=T, t_tile=tT,
        mask_t=(Tp != T))

    # Rough VMEM need: double-buffered K/V tiles + elementwise intermediates
    # + resident q/outputs + scratch.
    est = (4 * tT * tB * (Qp + Vp) * 4
           + 2 * tB * Qp * 4
           + 2 * tB * (Tp + Vp) * 4
           + tB * (Tp + Vp + LANE) * 4)
    vmem_limit = int(min(max(2 * est, 32 * 2**20), 48 * 2**20))

    cost = pl.CostEstimate(
        flops=int(2 * B * T * (Qd + Vd) + 6 * B * T),
        transcendentals=int(2 * B * T),
        bytes_accessed=int(4 * (B * Qd + T * B * (Qd + Vd) + B * T + B * Vd)),
    )

    energy2d, out2d = pl.pallas_call(
        kernel,
        out_shape=(
            jax.ShapeDtypeStruct((Bp, Tp), out_dtype),   # energy (lane-dense)
            jax.ShapeDtypeStruct((Bp, Vp), out_dtype),   # linear_combination
        ),
        grid_spec=pltpu.PrefetchScalarGridSpec(
            num_scalar_prefetch=0,
            grid=(n_b, n_t),
            in_specs=[
                pl.BlockSpec((tB, Qp), lambda bi, ti: (bi, 0)),
                pl.BlockSpec((tT, tB, Qp), lambda bi, ti: (ti, bi, 0)),
                pl.BlockSpec((tT, tB, Vp), lambda bi, ti: (ti, bi, 0)),
            ],
            out_specs=[
                pl.BlockSpec((tB, Tp), lambda bi, ti: (bi, 0)),
                pl.BlockSpec((tB, Vp), lambda bi, ti: (bi, 0)),
            ],
            scratch_shapes=[
                pltpu.VMEM((tB, Tp), jnp.float32),   # raw scores
                pltpu.VMEM((tB, 1), jnp.float32),    # running max
                pltpu.VMEM((tB, Vp), jnp.float32),   # output accumulator
            ],
        ),
        compiler_params=pltpu.CompilerParams(
            dimension_semantics=("parallel", "arbitrary"),
            vmem_limit_bytes=vmem_limit,
        ),
        cost_estimate=cost,
        interpret=interpret,
    )(q_in, k_in, v_in)

    energy = energy2d[:B, :T][:, None, :]          # -> [B, 1, T] (PyTorch shape)
    lin = out2d[:B, :Vd]                           # -> [B, V]
    return energy, lin


def _reference(query, keys, values):
    """Pure-JAX reference matching the PyTorch forward (full f32 precision)."""
    Q = query.shape[-1]
    scale = 1.0 / math.sqrt(Q)
    hi = jax.lax.Precision.HIGHEST
    q = query[:, None, :]                          # [B, 1, Q]
    k = jnp.transpose(keys, (1, 2, 0))             # [B, Q, T]
    energy = jnp.einsum("bij,bjk->bik", q, k, precision=hi) * scale
    energy = jax.nn.softmax(energy, axis=2)        # [B, 1, T]
    v = jnp.transpose(values, (1, 0, 2))           # [B, T, V]
    lin = jnp.einsum("bij,bjk->bik", energy, v, precision=hi)[:, 0, :]
    return energy, lin


if __name__ == "__main__":
    # Case 1: small shapes consistent with the module (B=2, T=8, Q=V=32).
    B, T, Qd, Vd = 2, 8, 32, 32
    kq, kk, kv = jax.random.split(jax.random.PRNGKey(0), 3)
    query = jax.random.normal(kq, (B, Qd), dtype=jnp.float32)
    keys = jax.random.normal(kk, (T, B, Qd), dtype=jnp.float32)
    values = jax.random.normal(kv, (T, B, Vd), dtype=jnp.float32)

    energy, lin = attention(query, keys, values)
    jax.block_until_ready((energy, lin))
    ref_energy, ref_lin = _reference(query, keys, values)
    assert energy.shape == (B, 1, T) and lin.shape == (B, Vd)
    assert jnp.allclose(energy, ref_energy, atol=2e-5, rtol=2e-5)
    assert jnp.allclose(lin, ref_lin, atol=2e-5, rtol=2e-5)

    # Case 2: exercises T tiling (online softmax) plus T/B/V padding + masking.
    B2, T2, Q2, V2 = 10, 300, 32, 48
    k1, k2, k3 = jax.random.split(jax.random.PRNGKey(1), 3)
    q2 = jax.random.normal(k1, (B2, Q2), dtype=jnp.float32)
    ks2 = jax.random.normal(k2, (T2, B2, Q2), dtype=jnp.float32)
    vs2 = jax.random.normal(k3, (T2, B2, V2), dtype=jnp.float32)
    e2, l2 = attention(q2, ks2, vs2, block_t=128)
    jax.block_until_ready((e2, l2))
    re2, rl2 = _reference(q2, ks2, vs2)
    assert e2.shape == (B2, 1, T2) and l2.shape == (B2, V2)
    assert jnp.allclose(e2, re2, atol=2e-5, rtol=2e-5)
    assert jnp.allclose(l2, rl2, atol=2e-5, rtol=2e-5)

    print("KERNEL_OK")
</pallas_src>

<mosaic_0001>
module attributes {stable_mosaic.version = 11 : i64} {
  func.func @_attention_kernel(%arg0: i32, %arg1: i32, %arg2: memref<8x128xf32, #tpu.memory_space<vmem>>, %arg3: memref<128x8x128xf32, #tpu.memory_space<vmem>>, %arg4: memref<128x8x128xf32, #tpu.memory_space<vmem>>, %arg5: memref<8x128xf32, #tpu.memory_space<vmem>>, %arg6: memref<8x128xf32, #tpu.memory_space<vmem>>, %arg7: memref<8x128xf32, #tpu.memory_space<vmem>>, %arg8: memref<8x1xf32, #tpu.memory_space<vmem>>, %arg9: memref<8x128xf32, #tpu.memory_space<vmem>>) attributes {dimension_semantics = [#tpu.dimension_semantics<parallel>, #tpu.dimension_semantics<arbitrary>], iteration_bounds = array<i64: 1, 1>, scalar_prefetch = 0 : i64, scratch_operands = 3 : i64, tpu.core_type = #tpu.core_type<tc>, window_params = [{transform_indices = @transform_0, window_bounds = array<i64: 8, 128>}, {transform_indices = @transform_1, window_bounds = array<i64: 128, 8, 128>}, {transform_indices = @transform_2, window_bounds = array<i64: 128, 8, 128>}, {transform_indices = @transform_3, window_bounds = array<i64: 8, 128>}, {transform_indices = @transform_4, window_bounds = array<i64: 8, 128>}]} {
    %c0_i32 = arith.constant 0 : i32
    %0 = arith.cmpi eq, %arg1, %c0_i32 : i32
    %1 = arith.extui %0 : i1 to i32
    %c0_i32_0 = arith.constant 0 : i32
    %2 = arith.cmpi ne, %1, %c0_i32_0 : i32
    scf.if %2 {
      %cst_24 = arith.constant 0xFF800000 : f32
      %48 = vector.broadcast %cst_24 : f32 to vector<8x1xf32>
      %c0_25 = arith.constant 0 : index
      %c0_26 = arith.constant 0 : index
      %49 = vector.load %arg8[%c0_25, %c0_26] : memref<8x1xf32, #tpu.memory_space<vmem>>, vector<8x1xf32>
      tpu.vector_store %arg8[%c0_25, %c0_26], %48 {strides = array<i32>} : memref<8x1xf32, #tpu.memory_space<vmem>>, vector<8x1xf32>,
      %cst_27 = arith.constant 0.000000e+00 : f32
      %50 = vector.broadcast %cst_27 : f32 to vector<8x128xf32>
      %c0_28 = arith.constant 0 : index
      %c0_29 = arith.constant 0 : index
      %51 = vector.load %arg9[%c0_28, %c0_29] : memref<8x128xf32, #tpu.memory_space<vmem>>, vector<8x128xf32>
      tpu.vector_store %arg9[%c0_28, %c0_29], %50 {strides = array<i32>} : memref<8x128xf32, #tpu.memory_space<vmem>>, vector<8x128xf32>,
    } else {
    }
    %c0 = arith.constant 0 : index
    %c0_1 = arith.constant 0 : index
    %3 = vector.load %arg2[%c0, %c0_1] : memref<8x128xf32, #tpu.memory_space<vmem>>, vector<8x128xf32>
    %c0_2 = arith.constant 0 : index
    %c0_3 = arith.constant 0 : index
    %c0_4 = arith.constant 0 : index
    %4 = vector.load %arg3[%c0_2, %c0_3, %c0_4] : memref<128x8x128xf32, #tpu.memory_space<vmem>>, vector<128x8x128xf32>
    %5 = vector.shape_cast %3 : vector<8x128xf32> to vector<1x8x128xf32>
    %6 = vector.broadcast %5 : vector<1x8x128xf32> to vector<128x8x128xf32>
    %7 = arith.mulf %6, %4 : vector<128x8x128xf32>
    %cst = arith.constant dense<0.000000e+00> : vector<128x8xf32>
    %8 = vector.multi_reduction <add>, %7, %cst [2] : vector<128x8x128xf32> to vector<128x8xf32>
    %cst_5 = arith.constant 0.176776692 : f32
    %9 = vector.broadcast %cst_5 : f32 to vector<128x8xf32>
    %10 = arith.mulf %8, %9 : vector<128x8xf32>
    %c128_i32 = arith.constant 128 : i32
    %11 = arith.muli %arg1, %c128_i32 : i32
    %12 = tpu.iota {dimensions = array<i32: 0>} : vector<128x8xi32>
    %13 = vector.broadcast %11 : i32 to vector<128x8xi32>
    %14 = arith.addi %13, %12 : vector<128x8xi32>
    %c8_i32 = arith.constant 8 : i32
    %15 = vector.broadcast %c8_i32 : i32 to vector<128x8xi32>
    %16 = arith.cmpi slt, %14, %15 : vector<128x8xi32>
    %cst_6 = arith.constant 0xFF800000 : f32
    %17 = vector.broadcast %cst_6 : f32 to vector<128x8xf32>
    %18 = arith.select %16, %10, %17 : vector<128x8xi1>, vector<128x8xf32>
    %19 = tpu.transpose %18, [1, 0] : vector<128x8xf32> -> vector<8x128xf32>
    %c128_i32_7 = arith.constant 128 : i32
    %20 = arith.muli %arg1, %c128_i32_7 : i32
    %21 = tpu.assume_multiple %20, 128 : i32
    %c0_8 = arith.constant 0 : index
    %22 = arith.index_cast %21 : i32 to index
    %23 = vector.load %arg7[%c0_8, %22] : memref<8x128xf32, #tpu.memory_space<vmem>>, vector<8x128xf32>
    tpu.vector_store %arg7[%c0_8, %22], %19 {strides = array<i32>} : memref<8x128xf32, #tpu.memory_space<vmem>>, vector<8x128xf32>,
    %c0_9 = arith.constant 0 : index
    %c0_10 = arith.constant 0 : index
    %24 = vector.load %arg8[%c0_9, %c0_10] : memref<8x1xf32, #tpu.memory_space<vmem>>, vector<8x1xf32>
    %cst_11 = arith.constant dense<0xFF800000> : vector<8xf32>
    %25 = vector.multi_reduction <maximumf>, %19, %cst_11 [1] : vector<8x128xf32> to vector<8xf32>
    %26 = vector.shape_cast %25 : vector<8xf32> to vector<8x1xf32>
    %27 = arith.maximumf %24, %26 : vector<8x1xf32>
    %28 = arith.subf %24, %27 : vector<8x1xf32>
    %29 = math.exp %28 : vector<8x1xf32>
    %30 = tpu.transpose %27, [1, 0] : vector<8x1xf32> -> vector<1x8xf32>
    %31 = vector.broadcast %30 : vector<1x8xf32> to vector<128x8xf32>
    %32 = arith.subf %18, %31 : vector<128x8xf32>
    %33 = math.exp %32 : vector<128x8xf32>
    %c0_12 = arith.constant 0 : index
    %c0_13 = arith.constant 0 : index
    %c0_14 = arith.constant 0 : index
    %34 = vector.load %arg4[%c0_12, %c0_13, %c0_14] : memref<128x8x128xf32, #tpu.memory_space<vmem>>, vector<128x8x128xf32>
    %35 = vector.shape_cast %33 : vector<128x8xf32> to vector<128x8x1xf32>
    %36 = vector.broadcast %35 : vector<128x8x1xf32> to vector<128x8x128xf32>
    %37 = arith.mulf %36, %34 : vector<128x8x128xf32>
    %cst_15 = arith.constant dense<0.000000e+00> : vector<8x128xf32>
    %38 = vector.multi_reduction <add>, %37, %cst_15 [0] : vector<128x8x128xf32> to vector<8x128xf32>
    %c0_16 = arith.constant 0 : index
    %c0_17 = arith.constant 0 : index
    %39 = vector.load %arg9[%c0_16, %c0_17] : memref<8x128xf32, #tpu.memory_space<vmem>>, vector<8x128xf32>
    %40 = vector.broadcast %29 : vector<8x1xf32> to vector<8x128xf32>
    %41 = arith.mulf %39, %40 : vector<8x128xf32>
    %42 = arith.addf %41, %38 : vector<8x128xf32>
    %c0_18 = arith.constant 0 : index
    %c0_19 = arith.constant 0 : index
    %43 = vector.load %arg9[%c0_18, %c0_19] : memref<8x128xf32, #tpu.memory_space<vmem>>, vector<8x128xf32>
    tpu.vector_store %arg9[%c0_18, %c0_19], %42 {strides = array<i32>} : memref<8x128xf32, #tpu.memory_space<vmem>>, vector<8x128xf32>,
    %c0_20 = arith.constant 0 : index
    %c0_21 = arith.constant 0 : index
    %44 = vector.load %arg8[%c0_20, %c0_21] : memref<8x1xf32, #tpu.memory_space<vmem>>, vector<8x1xf32>
    tpu.vector_store %arg8[%c0_20, %c0_21], %27 {strides = array<i32>} : memref<8x1xf32, #tpu.memory_space<vmem>>, vector<8x1xf32>,
    %c0_i32_22 = arith.constant 0 : i32
    %45 = arith.cmpi eq, %arg1, %c0_i32_22 : i32
    %46 = arith.extui %45 : i1 to i32
    %c0_i32_23 = arith.constant 0 : i32
    %47 = arith.cmpi ne, %46, %c0_i32_23 : i32
    scf.if %47 {
      %c0_24 = arith.constant 0 : index
      %c0_25 = arith.constant 0 : index
      %48 = vector.load %arg8[%c0_24, %c0_25] : memref<8x1xf32, #tpu.memory_space<vmem>>, vector<8x1xf32>
      %c0_26 = arith.constant 0 : index
      %c0_27 = arith.constant 0 : index
      %49 = vector.load %arg7[%c0_26, %c0_27] : memref<8x128xf32, #tpu.memory_space<vmem>>, vector<8x128xf32>
      %50 = vector.broadcast %48 : vector<8x1xf32> to vector<8x128xf32>
      %51 = arith.subf %49, %50 : vector<8x128xf32>
      %52 = math.exp %51 : vector<8x128xf32>
      %cst_28 = arith.constant dense<0.000000e+00> : vector<8xf32>
      %53 = vector.multi_reduction <add>, %52, %cst_28 [1] : vector<8x128xf32> to vector<8xf32>
      %54 = vector.shape_cast %53 : vector<8xf32> to vector<8x1xf32>
      %55 = tpu.reciprocal %54 : vector<8x1xf32> -> vector<8x1xf32>
      %56 = vector.broadcast %55 : vector<8x1xf32> to vector<8x128xf32>
      %57 = arith.mulf %52, %56 : vector<8x128xf32>
      %c0_29 = arith.constant 0 : index
      %c0_30 = arith.constant 0 : index
      %58 = vector.load %arg5[%c0_29, %c0_30] : memref<8x128xf32, #tpu.memory_space<vmem>>, vector<8x128xf32>
      tpu.vector_store %arg5[%c0_29, %c0_30], %57 {strides = array<i32>} : memref<8x128xf32, #tpu.memory_space<vmem>>, vector<8x128xf32>,
      %c0_31 = arith.constant 0 : index
      %c0_32 = arith.constant 0 : index
      %59 = vector.load %arg9[%c0_31, %c0_32] : memref<8x128xf32, #tpu.memory_space<vmem>>, vector<8x128xf32>
      %60 = vector.broadcast %55 : vector<8x1xf32> to vector<8x128xf32>
      %61 = arith.mulf %59, %60 : vector<8x128xf32>
      %c0_33 = arith.constant 0 : index
      %c0_34 = arith.constant 0 : index
      %62 = vector.load %arg6[%c0_33, %c0_34] : memref<8x128xf32, #tpu.memory_space<vmem>>, vector<8x128xf32>
      tpu.vector_store %arg6[%c0_33, %c0_34], %61 {strides = array<i32>} : memref<8x128xf32, #tpu.memory_space<vmem>>, vector<8x128xf32>,
    } else {
    }
    return
  }
  func.func @transform_0(%arg0: i32, %arg1: i32) -> (i32, i32) {
    %c0_i32 = arith.constant 0 : i32
    %c0_i32_0 = arith.constant 0 : i32
    return %arg0, %c0_i32 : i32, i32
  }
  func.func @transform_1(%arg0: i32, %arg1: i32) -> (i32, i32, i32) {
    %c0_i32 = arith.constant 0 : i32
    %c0_i32_0 = arith.constant 0 : i32
    return %arg1, %arg0, %c0_i32 : i32, i32, i32
  }
  func.func @transform_2(%arg0: i32, %arg1: i32) -> (i32, i32, i32) {
    %c0_i32 = arith.constant 0 : i32
    %c0_i32_0 = arith.constant 0 : i32
    return %arg1, %arg0, %c0_i32 : i32, i32, i32
  }
  func.func @transform_3(%arg0: i32, %arg1: i32) -> (i32, i32) {
    %c0_i32 = arith.constant 0 : i32
    %c0_i32_0 = arith.constant 0 : i32
    return %arg0, %c0_i32 : i32, i32
  }
  func.func @transform_4(%arg0: i32, %arg1: i32) -> (i32, i32) {
    %c0_i32 = arith.constant 0 : i32
    %c0_i32_0 = arith.constant 0 : i32
    return %arg0, %c0_i32 : i32, i32
  }
}

</mosaic_0001>

<llo_original>
// kernel: tpu_custom_call.1
$region0: #{tpu_custom_call.1}
  #allocation0 [shape = 'u32[]', space=smem, size = 0x4, offset = 0x4, fixed_abs, tag = 'smem constant byte address 0x4 - core index']
  #allocation1 [shape = 'u32[144,128]{1,0:T(1,128)}', space=vmem, size = 0x12000, scoped, tag = 'internal scratch']
  #allocation2 [shape = 'f32[8,128]{1,0:T(8,128)}', space=vmem, size = 0x1000, scoped, tag = 'scratch operand']
  #allocation3 [shape = 'f32[8,1]{1,0:T(8,128)}', space=vmem, size = 0x1000, scoped, tag = 'scratch operand']
  #allocation4 [shape = 'f32[8,128]{1,0:T(8,128)}', space=vmem, size = 0x1000, scoped, tag = 'scratch operand']
  %s0 = inlined_call_operand.hbm [shape: f32[8,128], index: 0, kind: input, shape index: {}]
  %s1 = inlined_call_operand.hbm [shape: f32[128,8,128], index: 1, kind: input, shape index: {}]
  %s2 = inlined_call_operand.hbm [shape: f32[128,8,128], index: 2, kind: input, shape index: {}]
  %s3 = inlined_call_operand.hbm [shape: f32[8,128], index: 3, kind: output, shape index: {0}]
  %s4 = inlined_call_operand.hbm [shape: f32[8,128], index: 4, kind: output, shape index: {1}]
  %5 = xla_tuple %s3, %s4
  %s6 = sld [smem:[#allocation0]]
  $region50: #{tpu_custom_call.1} parent=0
    _
  %s8 = ssub.s32 1, %s6
  %s9 = scalar_select 0, %s8, %s6
  $region1: #{tpu_custom_call.1} parent=0
    #allocation5 [shape = 'u8[4096]{0}', space=vmem, size = 0x1000, scoped, tag = 'input window, operand 0, single buffered']
    #allocation6 [shape = 's32[1]{0}', space=sflag, size = 0x4, scoped, tag = 'scoped memory for tpu_custom_call.1']
    #allocation7 [shape = 's32[1]{0}', space=sflag, size = 0x4, scoped, tag = 'scoped memory for tpu_custom_call.1']
    #allocation8 [shape = 'u8[524288]{0}', space=vmem, size = 0x80000, scoped, tag = 'input window, operand 1, single buffered']
    #allocation9 [shape = 's32[1]{0}', space=sflag, size = 0x4, scoped, tag = 'scoped memory for tpu_custom_call.1']
    #allocation10 [shape = 'u8[524288]{0}', space=vmem, size = 0x80000, scoped, tag = 'input window, operand 2, single buffered']
    #allocation11 [shape = 'u8[4096]{0}', space=vmem, size = 0x1000, scoped, tag = 'output window, operand 0, single buffered']
    #allocation12 [shape = 'u8[4096]{0}', space=vmem, size = 0x1000, scoped, tag = 'output window, operand 1, single buffered']
    #allocation13 [shape = 's32[1]{0}', space=sflag, size = 0x4, scoped, tag = 'scoped memory for tpu_custom_call.1']
    %10 = vsyncpa [#allocation6], 0
    %11 = vsyncpa [#allocation9], 0
    %12 = vsyncpa [#allocation7], 0
    %13 = vsyncpa [#allocation13], 0
    // Predicated region
    $region2: #{tpu_custom_call.1} parent=1 // pred_check
      _
    $region3: #{tpu_custom_call.1} parent=1 // pred_check_branch
      %15 = sbr.rel (0) target = $region5
    $region4: #{tpu_custom_call.1} parent=1 // pred_region
      %s17 = ssub.s32 128, 128
      %18 = vsyncadd [#allocation6], %s17
      %s20 = sshll.u32 [#allocation5], 4
      %s21 = int_to_ptr.vmem [resolvable:$true] %s20
      %23 = dma.hbm_to_vmem [thread:$0]  %s0, 128, %s21, [#allocation6]
    $region5: #{tpu_custom_call.1} parent=1 // pred_fallthru
      _
    // Predicated region
    $region6: #{tpu_custom_call.1} parent=1 // pred_check
      _
    $region7: #{tpu_custom_call.1} parent=1 // pred_check_branch
      %25 = sbr.rel (0) target = $region9
    $region8: #{tpu_custom_call.1} parent=1 // pred_region
      %s27 = ssub.s32 16384, 16384
      %28 = vsyncadd [#allocation9], %s27
      %s29 = sshll.u32 [#allocation8], 4
      %s30 = int_to_ptr.vmem [resolvable:$true] %s29
      %35 = dma.hbm_to_vmem [thread:$0]  %s1, 16384, %s30, [#allocation9], 128, 128, 8
    $region9: #{tpu_custom_call.1} parent=1 // pred_fallthru
      _
    // Predicated region
    $region10: #{tpu_custom_call.1} parent=1 // pred_check
      _
    $region11: #{tpu_custom_call.1} parent=1 // pred_check_branch
      %37 = sbr.rel (0) target = $region13
    $region12: #{tpu_custom_call.1} parent=1 // pred_region
      %s39 = ssub.s32 16384, 16384
      %40 = vsyncadd [#allocation9], %s39
      %s41 = sshll.u32 [#allocation10], 4
      %s42 = int_to_ptr.vmem [resolvable:$true] %s41
      %47 = dma.hbm_to_vmem [thread:$0]  %s2, 16384, %s42, [#allocation9], 128, 128, 8
    $region13: #{tpu_custom_call.1} parent=1 // pred_fallthru
      _
    // Predicated region
    $region14: #{tpu_custom_call.1} parent=1 // pred_check
      _
    $region15: #{tpu_custom_call.1} parent=1 // pred_check_branch
      %49 = sbr.rel (0) target = $region17
    $region16: #{tpu_custom_call.1} parent=1 // pred_region
      %50 = dma.done [#allocation6], 128
    $region17: #{tpu_custom_call.1} parent=1 // pred_fallthru
      _
    // Predicated region
    $region18: #{tpu_custom_call.1} parent=1 // pred_check
      _
    $region19: #{tpu_custom_call.1} parent=1 // pred_check_branch
      %52 = sbr.rel (0) target = $region21
    $region20: #{tpu_custom_call.1} parent=1 // pred_region
      %53 = dma.done [#allocation9], 16384
    $region21: #{tpu_custom_call.1} parent=1 // pred_fallthru
      _
    // Predicated region
    $region22: #{tpu_custom_call.1} parent=1 // pred_check
      _
    $region23: #{tpu_custom_call.1} parent=1 // pred_check_branch
      %55 = sbr.rel (0) target = $region25
    $region24: #{tpu_custom_call.1} parent=1 // pred_region
      %56 = dma.done [#allocation9], 16384
    $region25: #{tpu_custom_call.1} parent=1 // pred_fallthru
      _
    %p57 = scmp.eq.s32.totalorder 0, 0
    // Predicated region
    $region26: #{tpu_custom_call.1} parent=1 // pred_check
      %p58 = pneg %p57
    $region27: #{tpu_custom_call.1} parent=1 // pred_check_branch
      %60 = sbr.rel (%p58) target = $region29
    $region28: #{tpu_custom_call.1} parent=1 // pred_region
      %vm61 = vcmask 7168
      %62 = vst.msk [vmem:[#allocation3] sm:$0xff] %vm61, -inf
      %63 = vst [vmem:[#allocation4] sm:$0xff] 0.0
    $region29: #{tpu_custom_call.1} parent=1 // pred_fallthru
      _
    %v64 = vld [vmem:[#allocation5] sm:$0xff]
    %v65 = vld [vmem:[#allocation8] sm:$0xff]
    %v66 = vld [vmem:[#allocation8 + $0x8] sm:$0xff]
    %v67 = vld [vmem:[#allocation8 + $0x10] sm:$0xff]
    %v68 = vld [vmem:[#allocation8 + $0x18] sm:$0xff]
    %v69 = vld [vmem:[#allocation8 + $0x20] sm:$0xff]
    %v70 = vld [vmem:[#allocation8 + $0x28] sm:$0xff]
    %v71 = vld [vmem:[#allocation8 + $0x30] sm:$0xff]
    %v72 = vld [vmem:[#allocation8 + $0x38] sm:$0xff]
    %v73 = vld [vmem:[#allocation8 + $0x40] sm:$0xff]
    %v74 = vld [vmem:[#allocation8 + $0x48] sm:$0xff]
    %v75 = vld [vmem:[#allocation8 + $0x50] sm:$0xff]
    %v76 = vld [vmem:[#allocation8 + $0x58] sm:$0xff]
    %v77 = vld [vmem:[#allocation8 + $0x60] sm:$0xff]
    %v78 = vld [vmem:[#allocation8 + $0x68] sm:$0xff]
    %v79 = vld [vmem:[#allocation8 + $0x70] sm:$0xff]
    %v80 = vld [vmem:[#allocation8 + $0x78] sm:$0xff]
    %v81 = vld [vmem:[#allocation8 + $0x80] sm:$0xff]
    %v82 = vld [vmem:[#allocation8 + $0x88] sm:$0xff]
    %v83 = vld [vmem:[#allocation8 + $0x90] sm:$0xff]
    %v84 = vld [vmem:[#allocation8 + $0x98] sm:$0xff]
    %v85 = vld [vmem:[#allocation8 + $0xa0] sm:$0xff]
    %v86 = vld [vmem:[#allocation8 + $0xa8] sm:$0xff]
    %v87 = vld [vmem:[#allocation8 + $0xb0] sm:$0xff]
    %v88 = vld [vmem:[#allocation8 + $0xb8] sm:$0xff]
    %v89 = vld [vmem:[#allocation8 + $0xc0] sm:$0xff]
    %v90 = vld [vmem:[#allocation8 + $0xc8] sm:$0xff]
    %v91 = vld [vmem:[#allocation8 + $0xd0] sm:$0xff]
    %v92 = vld [vmem:[#allocation8 + $0xd8] sm:$0xff]
    %v93 = vld [vmem:[#allocation8 + $0xe0] sm:$0xff]
    %v94 = vld [vmem:[#allocation8 + $0xe8] sm:$0xff]
    %v95 = vld [vmem:[#allocation8 + $0xf0] sm:$0xff]
    %v96 = vld [vmem:[#allocation8 + $0xf8] sm:$0xff]
    %v97 = vld [vmem:[#allocation8 + $0x100] sm:$0xff]
    %v98 = vld [vmem:[#allocation8 + $0x108] sm:$0xff]
    %v99 = vld [vmem:[#allocation8 + $0x110] sm:$0xff]
    %v100 = vld [vmem:[#allocation8 + $0x118] sm:$0xff]
    %v101 = vld [vmem:[#allocation8 + $0x120] sm:$0xff]
    %v102 = vld [vmem:[#allocation8 + $0x128] sm:$0xff]
    %v103 = vld [vmem:[#allocation8 + $0x130] sm:$0xff]
    %v104 = vld [vmem:[#allocation8 + $0x138] sm:$0xff]
    %v105 = vld [vmem:[#allocation8 + $0x140] sm:$0xff]
    %v106 = vld [vmem:[#allocation8 + $0x148] sm:$0xff]
    %v107 = vld [vmem:[#allocation8 + $0x150] sm:$0xff]
    %v108 = vld [vmem:[#allocation8 + $0x158] sm:$0xff]
    %v109 = vld [vmem:[#allocation8 + $0x160] sm:$0xff]
    %v110 = vld [vmem:[#allocation8 + $0x168] sm:$0xff]
    %v111 = vld [vmem:[#allocation8 + $0x170] sm:$0xff]
    %v112 = vld [vmem:[#allocation8 + $0x178] sm:$0xff]
    %v113 = vld [vmem:[#allocation8 + $0x180] sm:$0xff]
    %v114 = vld [vmem:[#allocation8 + $0x188] sm:$0xff]
    %v115 = vld [vmem:[#allocation8 + $0x190] sm:$0xff]
    %v116 = vld [vmem:[#allocation8 + $0x198] sm:$0xff]
    %v117 = vld [vmem:[#allocation8 + $0x1a0] sm:$0xff]
    %v118 = vld [vmem:[#allocation8 + $0x1a8] sm:$0xff]
    %v119 = vld [vmem:[#allocation8 + $0x1b0] sm:$0xff]
    %v120 = vld [vmem:[#allocation8 + $0x1b8] sm:$0xff]
    %v121 = vld [vmem:[#allocation8 + $0x1c0] sm:$0xff]
    %v122 = vld [vmem:[#allocation8 + $0x1c8] sm:$0xff]
    %v123 = vld [vmem:[#allocation8 + $0x1d0] sm:$0xff]
    %v124 = vld [vmem:[#allocation8 + $0x1d8] sm:$0xff]
    %v125 = vld [vmem:[#allocation8 + $0x1e0] sm:$0xff]
    %v126 = vld [vmem:[#allocation8 + $0x1e8] sm:$0xff]
    %v127 = vld [vmem:[#allocation8 + $0x1f0] sm:$0xff]
    %v128 = vld [vmem:[#allocation8 + $0x1f8] sm:$0xff]
    %v129 = vld [vmem:[#allocation8 + $0x200] sm:$0xff]
    %v130 = vld [vmem:[#allocation8 + $0x208] sm:$0xff]
    %v131 = vld [vmem:[#allocation8 + $0x210] sm:$0xff]
    %v132 = vld [vmem:[#allocation8 + $0x218] sm:$0xff]
    %v133 = vld [vmem:[#allocation8 + $0x220] sm:$0xff]
    %v134 = vld [vmem:[#allocation8 + $0x228] sm:$0xff]
    %v135 = vld [vmem:[#allocation8 + $0x230] sm:$0xff]
    %v136 = vld [vmem:[#allocation8 + $0x238] sm:$0xff]
    %v137 = vld [vmem:[#allocation8 + $0x240] sm:$0xff]
    %v138 = vld [vmem:[#allocation8 + $0x248] sm:$0xff]
    %v139 = vld [vmem:[#allocation8 + $0x250] sm:$0xff]
    %v140 = vld [vmem:[#allocation8 + $0x258] sm:$0xff]
    %v141 = vld [vmem:[#allocation8 + $0x260] sm:$0xff]
    %v142 = vld [vmem:[#allocation8 + $0x268] sm:$0xff]
    %v143 = vld [vmem:[#allocation8 + $0x270] sm:$0xff]
    %v144 = vld [vmem:[#allocation8 + $0x278] sm:$0xff]
    %v145 = vld [vmem:[#allocation8 + $0x280] sm:$0xff]
    %v146 = vld [vmem:[#allocation8 + $0x288] sm:$0xff]
    %v147 = vld [vmem:[#allocation8 + $0x290] sm:$0xff]
    %v148 = vld [vmem:[#allocation8 + $0x298] sm:$0xff]
    %v149 = vld [vmem:[#allocation8 + $0x2a0] sm:$0xff]
    %v150 = vld [vmem:[#allocation8 + $0x2a8] sm:$0xff]
    %v151 = vld [vmem:[#allocation8 + $0x2b0] sm:$0xff]
    %v152 = vld [vmem:[#allocation8 + $0x2b8] sm:$0xff]
    %v153 = vld [vmem:[#allocation8 + $0x2c0] sm:$0xff]
    %v154 = vld [vmem:[#allocation8 + $0x2c8] sm:$0xff]
    %v155 = vld [vmem:[#allocation8 + $0x2d0] sm:$0xff]
    %v156 = vld [vmem:[#allocation8 + $0x2d8] sm:$0xff]
    %v157 = vld [vmem:[#allocation8 + $0x2e0] sm:$0xff]
    %v158 = vld [vmem:[#allocation8 + $0x2e8] sm:$0xff]
    %v159 = vld [vmem:[#allocation8 + $0x2f0] sm:$0xff]
    %v160 = vld [vmem:[#allocation8 + $0x2f8] sm:$0xff]
    %v161 = vld [vmem:[#allocation8 + $0x300] sm:$0xff]
    %v162 = vld [vmem:[#allocation8 + $0x308] sm:$0xff]
    %v163 = vld [vmem:[#allocation8 + $0x310] sm:$0xff]
    %v164 = vld [vmem:[#allocation8 + $0x318] sm:$0xff]
    %v165 = vld [vmem:[#allocation8 + $0x320] sm:$0xff]
    %v166 = vld [vmem:[#allocation8 + $0x328] sm:$0xff]
    %v167 = vld [vmem:[#allocation8 + $0x330] sm:$0xff]
    %v168 = vld [vmem:[#allocation8 + $0x338] sm:$0xff]
    %v169 = vld [vmem:[#allocation8 + $0x340] sm:$0xff]
    %v170 = vld [vmem:[#allocation8 + $0x348] sm:$0xff]
    %v171 = vld [vmem:[#allocation8 + $0x350] sm:$0xff]
    %v172 = vld [vmem:[#allocation8 + $0x358] sm:$0xff]
    %v173 = vld [vmem:[#allocation8 + $0x360] sm:$0xff]
    %v174 = vld [vmem:[#allocation8 + $0x368] sm:$0xff]
    %v175 = vld [vmem:[#allocation8 + $0x370] sm:$0xff]
    %v176 = vld [vmem:[#allocation8 + $0x378] sm:$0xff]
    %v177 = vld [vmem:[#allocation8 + $0x380] sm:$0xff]
    %v178 = vld [vmem:[#allocation8 + $0x388] sm:$0xff]
    %v179 = vld [vmem:[#allocation8 + $0x390] sm:$0xff]
    %v180 = vld [vmem:[#allocation8 + $0x398] sm:$0xff]
    %v181 = vld [vmem:[#allocation8 + $0x3a0] sm:$0xff]
    %v182 = vld [vmem:[#allocation8 + $0x3a8] sm:$0xff]
    %v183 = vld [vmem:[#allocation8 + $0x3b0] sm:$0xff]
    %v184 = vld [vmem:[#allocation8 + $0x3b8] sm:$0xff]
    %v185 = vld [vmem:[#allocation8 + $0x3c0] sm:$0xff]
    %v186 = vld [vmem:[#allocation8 + $0x3c8] sm:$0xff]
    %v187 = vld [vmem:[#allocation8 + $0x3d0] sm:$0xff]
    %v188 = vld [vmem:[#allocation8 + $0x3d8] sm:$0xff]
    %v189 = vld [vmem:[#allocation8 + $0x3e0] sm:$0xff]
    %v190 = vld [vmem:[#allocation8 + $0x3e8] sm:$0xff]
    %v191 = vld [vmem:[#allocation8 + $0x3f0] sm:$0xff]
    %v192 = vld [vmem:[#allocation8 + $0x3f8] sm:$0xff]
    %v193 = vmul.f32 %v64, %v65
    %v194 = vmul.f32 %v64, %v66
    %v195 = vmul.f32 %v64, %v67
    %v196 = vmul.f32 %v64, %v68
    %v197 = vmul.f32 %v64, %v69
    %v198 = vmul.f32 %v64, %v70
    %v199 = vmul.f32 %v64, %v71
    %v200 = vmul.f32 %v64, %v72
    %v201 = vmul.f32 %v64, %v73
    %v202 = vmul.f32 %v64, %v74
    %v203 = vmul.f32 %v64, %v75
    %v204 = vmul.f32 %v64, %v76
    %v205 = vmul.f32 %v64, %v77
    %v206 = vmul.f32 %v64, %v78
    %v207 = vmul.f32 %v64, %v79
    %v208 = vmul.f32 %v64, %v80
    %v209 = vmul.f32 %v64, %v81
    %v210 = vmul.f32 %v64, %v82
    %v211 = vmul.f32 %v64, %v83
    %v212 = vmul.f32 %v64, %v84
    %v213 = vmul.f32 %v64, %v85
    %v214 = vmul.f32 %v64, %v86
    %v215 = vmul.f32 %v64, %v87
    %v216 = vmul.f32 %v64, %v88
    %v217 = vmul.f32 %v64, %v89
    %v218 = vmul.f32 %v64, %v90
    %v219 = vmul.f32 %v64, %v91
    %v220 = vmul.f32 %v64, %v92
    %v221 = vmul.f32 %v64, %v93
    %v222 = vmul.f32 %v64, %v94
    %v223 = vmul.f32 %v64, %v95
    %v224 = vmul.f32 %v64, %v96
    %v225 = vmul.f32 %v64, %v97
    %v226 = vmul.f32 %v64, %v98
    %v227 = vmul.f32 %v64, %v99
    %v228 = vmul.f32 %v64, %v100
    %v229 = vmul.f32 %v64, %v101
    %v230 = vmul.f32 %v64, %v102
    %v231 = vmul.f32 %v64, %v103
    %v232 = vmul.f32 %v64, %v104
    %v233 = vmul.f32 %v64, %v105
    %v234 = vmul.f32 %v64, %v106
    %v235 = vmul.f32 %v64, %v107
    %v236 = vmul.f32 %v64, %v108
    %v237 = vmul.f32 %v64, %v109
    %v238 = vmul.f32 %v64, %v110
    %v239 = vmul.f32 %v64, %v111
    %v240 = vmul.f32 %v64, %v112
    %v241 = vmul.f32 %v64, %v113
    %v242 = vmul.f32 %v64, %v114
    %v243 = vmul.f32 %v64, %v115
    %v244 = vmul.f32 %v64, %v116
    %v245 = vmul.f32 %v64, %v117
    %v246 = vmul.f32 %v64, %v118
    %v247 = vmul.f32 %v64, %v119
    %v248 = vmul.f32 %v64, %v120
    %v249 = vmul.f32 %v64, %v121
    %v250 = vmul.f32 %v64, %v122
    %v251 = vmul.f32 %v64, %v123
    %v252 = vmul.f32 %v64, %v124
    %v253 = vmul.f32 %v64, %v125
    %v254 = vmul.f32 %v64, %v126
    %v255 = vmul.f32 %v64, %v127
    %v256 = vmul.f32 %v64, %v128
    %v257 = vmul.f32 %v64, %v129
    %v258 = vmul.f32 %v64, %v130
    %v259 = vmul.f32 %v64, %v131
    %v260 = vmul.f32 %v64, %v132
    %v261 = vmul.f32 %v64, %v133
    %v262 = vmul.f32 %v64, %v134
    %v263 = vmul.f32 %v64, %v135
    %v264 = vmul.f32 %v64, %v136
    %v265 = vmul.f32 %v64, %v137
    %v266 = vmul.f32 %v64, %v138
    %v267 = vmul.f32 %v64, %v139
    %v268 = vmul.f32 %v64, %v140
    %v269 = vmul.f32 %v64, %v141
    %v270 = vmul.f32 %v64, %v142
    %v271 = vmul.f32 %v64, %v143
    %v272 = vmul.f32 %v64, %v144
    %v273 = vmul.f32 %v64, %v145
    %v274 = vmul.f32 %v64, %v146
    %v275 = vmul.f32 %v64, %v147
    %v276 = vmul.f32 %v64, %v148
    %v277 = vmul.f32 %v64, %v149
    %v278 = vmul.f32 %v64, %v150
    %v279 = vmul.f32 %v64, %v151
    %v280 = vmul.f32 %v64, %v152
    %v281 = vmul.f32 %v64, %v153
    %v282 = vmul.f32 %v64, %v154
    %v283 = vmul.f32 %v64, %v155
    %v284 = vmul.f32 %v64, %v156
    %v285 = vmul.f32 %v64, %v157
    %v286 = vmul.f32 %v64, %v158
    %v287 = vmul.f32 %v64, %v159
    %v288 = vmul.f32 %v64, %v160
    %v289 = vmul.f32 %v64, %v161
    %v290 = vmul.f32 %v64, %v162
    %v291 = vmul.f32 %v64, %v163
    %v292 = vmul.f32 %v64, %v164
    %v293 = vmul.f32 %v64, %v165
    %v294 = vmul.f32 %v64, %v166
    %v295 = vmul.f32 %v64, %v167
    %v296 = vmul.f32 %v64, %v168
    %v297 = vmul.f32 %v64, %v169
    %v298 = vmul.f32 %v64, %v170
    %v299 = vmul.f32 %v64, %v171
    %v300 = vmul.f32 %v64, %v172
    %v301 = vmul.f32 %v64, %v173
    %v302 = vmul.f32 %v64, %v174
    %v303 = vmul.f32 %v64, %v175
    %v304 = vmul.f32 %v64, %v176
    %v305 = vmul.f32 %v64, %v177
    %v306 = vmul.f32 %v64, %v178
    %v307 = vmul.f32 %v64, %v179
    %v308 = vmul.f32 %v64, %v180
    %v309 = vmul.f32 %v64, %v181
    %v310 = vmul.f32 %v64, %v182
    %v311 = vmul.f32 %v64, %v183
    %v312 = vmul.f32 %v64, %v184
    %v313 = vmul.f32 %v64, %v185
    %v314 = vmul.f32 %v64, %v186
    %v315 = vmul.f32 %v64, %v187
    %v316 = vmul.f32 %v64, %v188
    %v317 = vmul.f32 %v64, %v189
    %v318 = vmul.f32 %v64, %v190
    %v319 = vmul.f32 %v64, %v191
    %v320 = vmul.f32 %v64, %v192
    %321 = vadd.xlane.f32.xlu0 %v193
    %v322 = vpop.xlane.xlu0 %321
    %323 = vadd.xlane.f32.xlu0 %v194
    %v324 = vpop.xlane.xlu0 %323
    %325 = vadd.xlane.f32.xlu0 %v195
    %v326 = vpop.xlane.xlu0 %325
    %327 = vadd.xlane.f32.xlu0 %v196
    %v328 = vpop.xlane.xlu0 %327
    %329 = vadd.xlane.f32.xlu0 %v197
    %v330 = vpop.xlane.xlu0 %329
    %331 = vadd.xlane.f32.xlu0 %v198
    %v332 = vpop.xlane.xlu0 %331
    %333 = vadd.xlane.f32.xlu0 %v199
    %v334 = vpop.xlane.xlu0 %333
    %335 = vadd.xlane.f32.xlu0 %v200
    %v336 = vpop.xlane.xlu0 %335
    %337 = vadd.xlane.f32.xlu0 %v201
    %v338 = vpop.xlane.xlu0 %337
    %339 = vadd.xlane.f32.xlu0 %v202
    %v340 = vpop.xlane.xlu0 %339
    %341 = vadd.xlane.f32.xlu0 %v203
    %v342 = vpop.xlane.xlu0 %341
    %343 = vadd.xlane.f32.xlu0 %v204
    %v344 = vpop.xlane.xlu0 %343
    %345 = vadd.xlane.f32.xlu0 %v205
    %v346 = vpop.xlane.xlu0 %345
    %347 = vadd.xlane.f32.xlu0 %v206
    %v348 = vpop.xlane.xlu0 %347
    %349 = vadd.xlane.f32.xlu0 %v207
    %v350 = vpop.xlane.xlu0 %349
    %351 = vadd.xlane.f32.xlu0 %v208
    %v352 = vpop.xlane.xlu0 %351
    %353 = vadd.xlane.f32.xlu0 %v209
    %v354 = vpop.xlane.xlu0 %353
    %355 = vadd.xlane.f32.xlu0 %v210
    %v356 = vpop.xlane.xlu0 %355
    %357 = vadd.xlane.f32.xlu0 %v211
    %v358 = vpop.xlane.xlu0 %357
    %359 = vadd.xlane.f32.xlu0 %v212
    %v360 = vpop.xlane.xlu0 %359
    %361 = vadd.xlane.f32.xlu0 %v213
    %v362 = vpop.xlane.xlu0 %361
    %363 = vadd.xlane.f32.xlu0 %v214
    %v364 = vpop.xlane.xlu0 %363
    %365 = vadd.xlane.f32.xlu0 %v215
    %v366 = vpop.xlane.xlu0 %365
    %367 = vadd.xlane.f32.xlu0 %v216
    %v368 = vpop.xlane.xlu0 %367
    %369 = vadd.xlane.f32.xlu0 %v217
    %v370 = vpop.xlane.xlu0 %369
    %371 = vadd.xlane.f32.xlu0 %v218
    %v372 = vpop.xlane.xlu0 %371
    %373 = vadd.xlane.f32.xlu0 %v219
    %v374 = vpop.xlane.xlu0 %373
    %375 = vadd.xlane.f32.xlu0 %v220
    %v376 = vpop.xlane.xlu0 %375
    %377 = vadd.xlane.f32.xlu0 %v221
    %v378 = vpop.xlane.xlu0 %377
    %379 = vadd.xlane.f32.xlu0 %v222
    %v380 = vpop.xlane.xlu0 %379
    %381 = vadd.xlane.f32.xlu0 %v223
    %v382 = vpop.xlane.xlu0 %381
    %383 = vadd.xlane.f32.xlu0 %v224
    %v384 = vpop.xlane.xlu0 %383
    %385 = vadd.xlane.f32.xlu0 %v225
    %v386 = vpop.xlane.xlu0 %385
    %387 = vadd.xlane.f32.xlu0 %v226
    %v388 = vpop.xlane.xlu0 %387
    %389 = vadd.xlane.f32.xlu0 %v227
    %v390 = vpop.xlane.xlu0 %389
    %391 = vadd.xlane.f32.xlu0 %v228
    %v392 = vpop.xlane.xlu0 %391
    %393 = vadd.xlane.f32.xlu0 %v229
    %v394 = vpop.xlane.xlu0 %393
    %395 = vadd.xlane.f32.xlu0 %v230
    %v396 = vpop.xlane.xlu0 %395
    %397 = vadd.xlane.f32.xlu0 %v231
    %v398 = vpop.xlane.xlu0 %397
    %399 = vadd.xlane.f32.xlu0 %v232
    %v400 = vpop.xlane.xlu0 %399
    %401 = vadd.xlane.f32.xlu0 %v233
    %v402 = vpop.xlane.xlu0 %401
    %403 = vadd.xlane.f32.xlu0 %v234
    %v404 = vpop.xlane.xlu0 %403
    %405 = vadd.xlane.f32.xlu0 %v235
    %v406 = vpop.xlane.xlu0 %405
    %407 = vadd.xlane.f32.xlu0 %v236
    %v408 = vpop.xlane.xlu0 %407
    %409 = vadd.xlane.f32.xlu0 %v237
    %v410 = vpop.xlane.xlu0 %409
    %411 = vadd.xlane.f32.xlu0 %v238
    %v412 = vpop.xlane.xlu0 %411
    %413 = vadd.xlane.f32.xlu0 %v239
    %v414 = vpop.xlane.xlu0 %413
    %415 = vadd.xlane.f32.xlu0 %v240
    %v416 = vpop.xlane.xlu0 %415
    %417 = vadd.xlane.f32.xlu0 %v241
    %v418 = vpop.xlane.xlu0 %417
    %419 = vadd.xlane.f32.xlu0 %v242
    %v420 = vpop.xlane.xlu0 %419
    %421 = vadd.xlane.f32.xlu0 %v243
    %v422 = vpop.xlane.xlu0 %421
    %423 = vadd.xlane.f32.xlu0 %v244
    %v424 = vpop.xlane.xlu0 %423
    %425 = vadd.xlane.f32.xlu0 %v245
    %v426 = vpop.xlane.xlu0 %425
    %427 = vadd.xlane.f32.xlu0 %v246
    %v428 = vpop.xlane.xlu0 %427
    %429 = vadd.xlane.f32.xlu0 %v247
    %v430 = vpop.xlane.xlu0 %429
    %431 = vadd.xlane.f32.xlu0 %v248
    %v432 = vpop.xlane.xlu0 %431
    %433 = vadd.xlane.f32.xlu0 %v249
    %v434 = vpop.xlane.xlu0 %433
    %435 = vadd.xlane.f32.xlu0 %v250
    %v436 = vpop.xlane.xlu0 %435
    %437 = vadd.xlane.f32.xlu0 %v251
    %v438 = vpop.xlane.xlu0 %437
    %439 = vadd.xlane.f32.xlu0 %v252
    %v440 = vpop.xlane.xlu0 %439
    %441 = vadd.xlane.f32.xlu0 %v253
    %v442 = vpop.xlane.xlu0 %441
    %443 = vadd.xlane.f32.xlu0 %v254
    %v444 = vpop.xlane.xlu0 %443
    %445 = vadd.xlane.f32.xlu0 %v255
    %v446 = vpop.xlane.xlu0 %445
    %447 = vadd.xlane.f32.xlu0 %v256
    %v448 = vpop.xlane.xlu0 %447
    %449 = vadd.xlane.f32.xlu0 %v257
    %v450 = vpop.xlane.xlu0 %449
    %451 = vadd.xlane.f32.xlu0 %v258
    %v452 = vpop.xlane.xlu0 %451
    %453 = vadd.xlane.f32.xlu0 %v259
    %v454 = vpop.xlane.xlu0 %453
    %455 = vadd.xlane.f32.xlu0 %v260
    %v456 = vpop.xlane.xlu0 %455
    %457 = vadd.xlane.f32.xlu0 %v261
    %v458 = vpop.xlane.xlu0 %457
    %459 = vadd.xlane.f32.xlu0 %v262
    %v460 = vpop.xlane.xlu0 %459
    %461 = vadd.xlane.f32.xlu0 %v263
    %v462 = vpop.xlane.xlu0 %461
    %463 = vadd.xlane.f32.xlu0 %v264
    %v464 = vpop.xlane.xlu0 %463
    %465 = vadd.xlane.f32.xlu0 %v265
    %v466 = vpop.xlane.xlu0 %465
    %467 = vadd.xlane.f32.xlu0 %v266
    %v468 = vpop.xlane.xlu0 %467
    %469 = vadd.xlane.f32.xlu0 %v267
    %v470 = vpop.xlane.xlu0 %469
    %471 = vadd.xlane.f32.xlu0 %v268
    %v472 = vpop.xlane.xlu0 %471
    %473 = vadd.xlane.f32.xlu0 %v269
    %v474 = vpop.xlane.xlu0 %473
    %475 = vadd.xlane.f32.xlu0 %v270
    %v476 = vpop.xlane.xlu0 %475
    %477 = vadd.xlane.f32.xlu0 %v271
    %v478 = vpop.xlane.xlu0 %477
    %479 = vadd.xlane.f32.xlu0 %v272
    %v480 = vpop.xlane.xlu0 %479
    %481 = vadd.xlane.f32.xlu0 %v273
    %v482 = vpop.xlane.xlu0 %481
    %483 = vadd.xlane.f32.xlu0 %v274
    %v484 = vpop.xlane.xlu0 %483
    %485 = vadd.xlane.f32.xlu0 %v275
    %v486 = vpop.xlane.xlu0 %485
    %487 = vadd.xlane.f32.xlu0 %v276
    %v488 = vpop.xlane.xlu0 %487
    %489 = vadd.xlane.f32.xlu0 %v277
    %v490 = vpop.xlane.xlu0 %489
    %491 = vadd.xlane.f32.xlu0 %v278
    %v492 = vpop.xlane.xlu0 %491
    %493 = vadd.xlane.f32.xlu0 %v279
    %v494 = vpop.xlane.xlu0 %493
    %495 = vadd.xlane.f32.xlu0 %v280
    %v496 = vpop.xlane.xlu0 %495
    %497 = vadd.xlane.f32.xlu0 %v281
    %v498 = vpop.xlane.xlu0 %497
    %499 = vadd.xlane.f32.xlu0 %v282
    %v500 = vpop.xlane.xlu0 %499
    %501 = vadd.xlane.f32.xlu0 %v283
    %v502 = vpop.xlane.xlu0 %501
    %503 = vadd.xlane.f32.xlu0 %v284
    %v504 = vpop.xlane.xlu0 %503
    %505 = vadd.xlane.f32.xlu0 %v285
    %v506 = vpop.xlane.xlu0 %505
    %507 = vadd.xlane.f32.xlu0 %v286
    %v508 = vpop.xlane.xlu0 %507
    %509 = vadd.xlane.f32.xlu0 %v287
    %v510 = vpop.xlane.xlu0 %509
    %511 = vadd.xlane.f32.xlu0 %v288
    %v512 = vpop.xlane.xlu0 %511
    %513 = vadd.xlane.f32.xlu0 %v289
    %v514 = vpop.xlane.xlu0 %513
    %515 = vadd.xlane.f32.xlu0 %v290
    %v516 = vpop.xlane.xlu0 %515
    %517 = vadd.xlane.f32.xlu0 %v291
    %v518 = vpop.xlane.xlu0 %517
    %519 = vadd.xlane.f32.xlu0 %v292
    %v520 = vpop.xlane.xlu0 %519
    %521 = vadd.xlane.f32.xlu0 %v293
    %v522 = vpop.xlane.xlu0 %521
    %523 = vadd.xlane.f32.xlu0 %v294
    %v524 = vpop.xlane.xlu0 %523
    %525 = vadd.xlane.f32.xlu0 %v295
    %v526 = vpop.xlane.xlu0 %525
    %527 = vadd.xlane.f32.xlu0 %v296
    %v528 = vpop.xlane.xlu0 %527
    %529 = vadd.xlane.f32.xlu0 %v297
    %v530 = vpop.xlane.xlu0 %529
    %531 = vadd.xlane.f32.xlu0 %v298
    %v532 = vpop.xlane.xlu0 %531
    %533 = vadd.xlane.f32.xlu0 %v299
    %v534 = vpop.xlane.xlu0 %533
    %535 = vadd.xlane.f32.xlu0 %v300
    %v536 = vpop.xlane.xlu0 %535
    %537 = vadd.xlane.f32.xlu0 %v301
    %v538 = vpop.xlane.xlu0 %537
    %539 = vadd.xlane.f32.xlu0 %v302
    %v540 = vpop.xlane.xlu0 %539
    %541 = vadd.xlane.f32.xlu0 %v303
    %v542 = vpop.xlane.xlu0 %541
    %543 = vadd.xlane.f32.xlu0 %v304
    %v544 = vpop.xlane.xlu0 %543
    %545 = vadd.xlane.f32.xlu0 %v305
    %v546 = vpop.xlane.xlu0 %545
    %547 = vadd.xlane.f32.xlu0 %v306
    %v548 = vpop.xlane.xlu0 %547
    %549 = vadd.xlane.f32.xlu0 %v307
    %v550 = vpop.xlane.xlu0 %549
    %551 = vadd.xlane.f32.xlu0 %v308
    %v552 = vpop.xlane.xlu0 %551
    %553 = vadd.xlane.f32.xlu0 %v309
    %v554 = vpop.xlane.xlu0 %553
    %555 = vadd.xlane.f32.xlu0 %v310
    %v556 = vpop.xlane.xlu0 %555
    %557 = vadd.xlane.f32.xlu0 %v311
    %v558 = vpop.xlane.xlu0 %557
    %559 = vadd.xlane.f32.xlu0 %v312
    %v560 = vpop.xlane.xlu0 %559
    %561 = vadd.xlane.f32.xlu0 %v313
    %v562 = vpop.xlane.xlu0 %561
    %563 = vadd.xlane.f32.xlu0 %v314
    %v564 = vpop.xlane.xlu0 %563
    %565 = vadd.xlane.f32.xlu0 %v315
    %v566 = vpop.xlane.xlu0 %565
    %567 = vadd.xlane.f32.xlu0 %v316
    %v568 = vpop.xlane.xlu0 %567
    %569 = vadd.xlane.f32.xlu0 %v317
    %v570 = vpop.xlane.xlu0 %569
    %571 = vadd.xlane.f32.xlu0 %v318
    %v572 = vpop.xlane.xlu0 %571
    %573 = vadd.xlane.f32.xlu0 %v319
    %v574 = vpop.xlane.xlu0 %573
    %575 = vadd.xlane.f32.xlu0 %v320
    %v576 = vpop.xlane.xlu0 %575
    %v577 = vmul.f32 %v322, 0.17677669
    %v578 = vmul.f32 %v324, 0.17677669
    %v579 = vmul.f32 %v326, 0.17677669
    %v580 = vmul.f32 %v328, 0.17677669
    %v581 = vmul.f32 %v330, 0.17677669
    %v582 = vmul.f32 %v332, 0.17677669
    %v583 = vmul.f32 %v334, 0.17677669
    %v584 = vmul.f32 %v336, 0.17677669
    %v585 = vmul.f32 %v338, 0.17677669
    %v586 = vmul.f32 %v340, 0.17677669
    %v587 = vmul.f32 %v342, 0.17677669
    %v588 = vmul.f32 %v344, 0.17677669
    %v589 = vmul.f32 %v346, 0.17677669
    %v590 = vmul.f32 %v348, 0.17677669
    %v591 = vmul.f32 %v350, 0.17677669
    %v592 = vmul.f32 %v352, 0.17677669
    %v593 = vmul.f32 %v354, 0.17677669
    %v594 = vmul.f32 %v356, 0.17677669
    %v595 = vmul.f32 %v358, 0.17677669
    %v596 = vmul.f32 %v360, 0.17677669
    %v597 = vmul.f32 %v362, 0.17677669
    %v598 = vmul.f32 %v364, 0.17677669
    %v599 = vmul.f32 %v366, 0.17677669
    %v600 = vmul.f32 %v368, 0.17677669
    %v601 = vmul.f32 %v370, 0.17677669
    %v602 = vmul.f32 %v372, 0.17677669
    %v603 = vmul.f32 %v374, 0.17677669
    %v604 = vmul.f32 %v376, 0.17677669
    %v605 = vmul.f32 %v378, 0.17677669
    %v606 = vmul.f32 %v380, 0.17677669
    %v607 = vmul.f32 %v382, 0.17677669
    %v608 = vmul.f32 %v384, 0.17677669
    %v609 = vmul.f32 %v386, 0.17677669
    %v610 = vmul.f32 %v388, 0.17677669
    %v611 = vmul.f32 %v390, 0.17677669
    %v612 = vmul.f32 %v392, 0.17677669
    %v613 = vmul.f32 %v394, 0.17677669
    %v614 = vmul.f32 %v396, 0.17677669
    %v615 = vmul.f32 %v398, 0.17677669
    %v616 = vmul.f32 %v400, 0.17677669
    %v617 = vmul.f32 %v402, 0.17677669
    %v618 = vmul.f32 %v404, 0.17677669
    %v619 = vmul.f32 %v406, 0.17677669
    %v620 = vmul.f32 %v408, 0.17677669
    %v621 = vmul.f32 %v410, 0.17677669
    %v622 = vmul.f32 %v412, 0.17677669
    %v623 = vmul.f32 %v414, 0.17677669
    %v624 = vmul.f32 %v416, 0.17677669
    %v625 = vmul.f32 %v418, 0.17677669
    %v626 = vmul.f32 %v420, 0.17677669
    %v627 = vmul.f32 %v422, 0.17677669
    %v628 = vmul.f32 %v424, 0.17677669
    %v629 = vmul.f32 %v426, 0.17677669
    %v630 = vmul.f32 %v428, 0.17677669
    %v631 = vmul.f32 %v430, 0.17677669
    %v632 = vmul.f32 %v432, 0.17677669
    %v633 = vmul.f32 %v434, 0.17677669
    %v634 = vmul.f32 %v436, 0.17677669
    %v635 = vmul.f32 %v438, 0.17677669
    %v636 = vmul.f32 %v440, 0.17677669
    %v637 = vmul.f32 %v442, 0.17677669
    %v638 = vmul.f32 %v444, 0.17677669
    %v639 = vmul.f32 %v446, 0.17677669
    %v640 = vmul.f32 %v448, 0.17677669
    %v641 = vmul.f32 %v450, 0.17677669
    %v642 = vmul.f32 %v452, 0.17677669
    %v643 = vmul.f32 %v454, 0.17677669
    %v644 = vmul.f32 %v456, 0.17677669
    %v645 = vmul.f32 %v458, 0.17677669
    %v646 = vmul.f32 %v460, 0.17677669
    %v647 = vmul.f32 %v462, 0.17677669
    %v648 = vmul.f32 %v464, 0.17677669
    %v649 = vmul.f32 %v466, 0.17677669
    %v650 = vmul.f32 %v468, 0.17677669
    %v651 = vmul.f32 %v470, 0.17677669
    %v652 = vmul.f32 %v472, 0.17677669
    %v653 = vmul.f32 %v474, 0.17677669
    %v654 = vmul.f32 %v476, 0.17677669
    %v655 = vmul.f32 %v478, 0.17677669
    %v656 = vmul.f32 %v480, 0.17677669
    %v657 = vmul.f32 %v482, 0.17677669
    %v658 = vmul.f32 %v484, 0.17677669
    %v659 = vmul.f32 %v486, 0.17677669
    %v660 = vmul.f32 %v488, 0.17677669
    %v661 = vmul.f32 %v490, 0.17677669
    %v662 = vmul.f32 %v492, 0.17677669
    %v663 = vmul.f32 %v494, 0.17677669
    %v664 = vmul.f32 %v496, 0.17677669
    %v665 = vmul.f32 %v498, 0.17677669
    %v666 = vmul.f32 %v500, 0.17677669
    %v667 = vmul.f32 %v502, 0.17677669
    %v668 = vmul.f32 %v504, 0.17677669
    %v669 = vmul.f32 %v506, 0.17677669
    %v670 = vmul.f32 %v508, 0.17677669
    %v671 = vmul.f32 %v510, 0.17677669
    %v672 = vmul.f32 %v512, 0.17677669
    %v673 = vmul.f32 %v514, 0.17677669
    %v674 = vmul.f32 %v516, 0.17677669
    %v675 = vmul.f32 %v518, 0.17677669
    %v676 = vmul.f32 %v520, 0.17677669
    %v677 = vmul.f32 %v522, 0.17677669
    %v678 = vmul.f32 %v524, 0.17677669
    %v679 = vmul.f32 %v526, 0.17677669
    %v680 = vmul.f32 %v528, 0.17677669
    %v681 = vmul.f32 %v530, 0.17677669
    %v682 = vmul.f32 %v532, 0.17677669
    %v683 = vmul.f32 %v534, 0.17677669
    %v684 = vmul.f32 %v536, 0.17677669
    %v685 = vmul.f32 %v538, 0.17677669
    %v686 = vmul.f32 %v540, 0.17677669
    %v687 = vmul.f32 %v542, 0.17677669
    %v688 = vmul.f32 %v544, 0.17677669
    %v689 = vmul.f32 %v546, 0.17677669
    %v690 = vmul.f32 %v548, 0.17677669
    %v691 = vmul.f32 %v550, 0.17677669
    %v692 = vmul.f32 %v552, 0.17677669
    %v693 = vmul.f32 %v554, 0.17677669
    %v694 = vmul.f32 %v556, 0.17677669
    %v695 = vmul.f32 %v558, 0.17677669
    %v696 = vmul.f32 %v560, 0.17677669
    %v697 = vmul.f32 %v562, 0.17677669
    %v698 = vmul.f32 %v564, 0.17677669
    %v699 = vmul.f32 %v566, 0.17677669
    %v700 = vmul.f32 %v568, 0.17677669
    %v701 = vmul.f32 %v570, 0.17677669
    %v702 = vmul.f32 %v572, 0.17677669
    %v703 = vmul.f32 %v574, 0.17677669
    %v704 = vmul.f32 %v576, 0.17677669
    %s705 = smul.u32 0, 128
    %v706 = vlaneseq
    %v707 = vshrl.u32 %v706, 7
    %v708 = vadd.s32 %v707, 8
    %v709 = vadd.s32 %v707, 16
    %v710 = vadd.s32 %v707, 24
    %v711 = vadd.s32 %v707, 32
    %v712 = vadd.s32 %v707, 40
    %v713 = vadd.s32 %v707, 48
    %v714 = vadd.s32 %v707, 56
    %v715 = vadd.s32 %v707, 64
    %v716 = vadd.s32 %v707, 72
    %v717 = vadd.s32 %v707, 80
    %v718 = vadd.s32 %v707, 88
    %v719 = vadd.s32 %v707, 96
    %v720 = vadd.s32 %v707, 104
    %v721 = vadd.s32 %v707, 112
    %v722 = vadd.s32 %v707, 120
    %v723 = vstv %s705
    %v724 = vadd.s32 %v723, %v707
    %v725 = vadd.s32 %v723, %v708
    %v726 = vadd.s32 %v723, %v709
    %v727 = vadd.s32 %v723, %v710
    %v728 = vadd.s32 %v723, %v711
    %v729 = vadd.s32 %v723, %v712
    %v730 = vadd.s32 %v723, %v713
    %v731 = vadd.s32 %v723, %v714
    %v732 = vadd.s32 %v723, %v715
    %v733 = vadd.s32 %v723, %v716
    %v734 = vadd.s32 %v723, %v717
    %v735 = vadd.s32 %v723, %v718
    %v736 = vadd.s32 %v723, %v719
    %v737 = vadd.s32 %v723, %v720
    %v738 = vadd.s32 %v723, %v721
    %v739 = vadd.s32 %v723, %v722
    %vm740 = vcmp.lt.s32.totalorder %v724, 8
    %vm741 = vcmp.lt.s32.totalorder %v725, 8
    %vm742 = vcmp.lt.s32.totalorder %v726, 8
    %vm743 = vcmp.lt.s32.totalorder %v727, 8
    %vm744 = vcmp.lt.s32.totalorder %v728, 8
    %vm745 = vcmp.lt.s32.totalorder %v729, 8
    %vm746 = vcmp.lt.s32.totalorder %v730, 8
    %vm747 = vcmp.lt.s32.totalorder %v731, 8
    %vm748 = vcmp.lt.s32.totalorder %v732, 8
    %vm749 = vcmp.lt.s32.totalorder %v733, 8
    %vm750 = vcmp.lt.s32.totalorder %v734, 8
    %vm751 = vcmp.lt.s32.totalorder %v735, 8
    %vm752 = vcmp.lt.s32.totalorder %v736, 8
    %vm753 = vcmp.lt.s32.totalorder %v737, 8
    %vm754 = vcmp.lt.s32.totalorder %v738, 8
    %vm755 = vcmp.lt.s32.totalorder %v739, 8
    %v884 = vlaneseq
    %v885 = vand.u32 %v884, 127
    %v886 = vlaneseq
    %v887 = vshrl.u32 %v886, 7
    %v888 = vsub.s32 %v885, %v887
    %v889 = vrot.slane %v577, %v888
    %v890 = vlaneseq
    %v891 = vshrl.u32 %v890, 7
    %v892 = vsub.s32 %v885, %v891
    %v893 = vrot.slane %v578, %v892
    %v894 = vlaneseq
    %v895 = vshrl.u32 %v894, 7
    %v896 = vsub.s32 %v885, %v895
    %v897 = vrot.slane %v579, %v896
    %v898 = vlaneseq
    %v899 = vshrl.u32 %v898, 7
    %v900 = vsub.s32 %v885, %v899
    %v901 = vrot.slane %v580, %v900
    %v902 = vlaneseq
    %v903 = vshrl.u32 %v902, 7
    %v904 = vsub.s32 %v885, %v903
    %v905 = vrot.slane %v581, %v904
    %v906 = vlaneseq
    %v907 = vshrl.u32 %v906, 7
    %v908 = vsub.s32 %v885, %v907
    %v909 = vrot.slane %v582, %v908
    %v910 = vlaneseq
    %v911 = vshrl.u32 %v910, 7
    %v912 = vsub.s32 %v885, %v911
    %v913 = vrot.slane %v583, %v912
    %v914 = vlaneseq
    %v915 = vshrl.u32 %v914, 7
    %v916 = vsub.s32 %v885, %v915
    %v917 = vrot.slane %v584, %v916
    %v918 = vlaneseq
    %v919 = vshrl.u32 %v918, 7
    %v920 = vsub.s32 %v885, %v919
    %v921 = vrot.slane %v585, %v920
    %v922 = vlaneseq
    %v923 = vshrl.u32 %v922, 7
    %v924 = vsub.s32 %v885, %v923
    %v925 = vrot.slane %v586, %v924
    %v926 = vlaneseq
    %v927 = vshrl.u32 %v926, 7
    %v928 = vsub.s32 %v885, %v927
    %v929 = vrot.slane %v587, %v928
    %v930 = vlaneseq
    %v931 = vshrl.u32 %v930, 7
    %v932 = vsub.s32 %v885, %v931
    %v933 = vrot.slane %v588, %v932
    %v934 = vlaneseq
    %v935 = vshrl.u32 %v934, 7
    %v936 = vsub.s32 %v885, %v935
    %v937 = vrot.slane %v589, %v936
    %v938 = vlaneseq
    %v939 = vshrl.u32 %v938, 7
    %v940 = vsub.s32 %v885, %v939
    %v941 = vrot.slane %v590, %v940
    %v942 = vlaneseq
    %v943 = vshrl.u32 %v942, 7
    %v944 = vsub.s32 %v885, %v943
    %v945 = vrot.slane %v591, %v944
    %v946 = vlaneseq
    %v947 = vshrl.u32 %v946, 7
    %v948 = vsub.s32 %v885, %v947
    %v949 = vrot.slane %v592, %v948
    %v950 = vlaneseq
    %v951 = vshrl.u32 %v950, 7
    %v952 = vsub.s32 %v885, %v951
    %v953 = vrot.slane %v593, %v952
    %v954 = vlaneseq
    %v955 = vshrl.u32 %v954, 7
    %v956 = vsub.s32 %v885, %v955
    %v957 = vrot.slane %v594, %v956
    %v958 = vlaneseq
    %v959 = vshrl.u32 %v958, 7
    %v960 = vsub.s32 %v885, %v959
    %v961 = vrot.slane %v595, %v960
    %v962 = vlaneseq
    %v963 = vshrl.u32 %v962, 7
    %v964 = vsub.s32 %v885, %v963
    %v965 = vrot.slane %v596, %v964
    %v966 = vlaneseq
    %v967 = vshrl.u32 %v966, 7
    %v968 = vsub.s32 %v885, %v967
    %v969 = vrot.slane %v597, %v968
    %v970 = vlaneseq
    %v971 = vshrl.u32 %v970, 7
    %v972 = vsub.s32 %v885, %v971
    %v973 = vrot.slane %v598, %v972
    %v974 = vlaneseq
    %v975 = vshrl.u32 %v974, 7
    %v976 = vsub.s32 %v885, %v975
    %v977 = vrot.slane %v599, %v976
    %v978 = vlaneseq
    %v979 = vshrl.u32 %v978, 7
    %v980 = vsub.s32 %v885, %v979
    %v981 = vrot.slane %v600, %v980
    %v982 = vlaneseq
    %v983 = vshrl.u32 %v982, 7
    %v984 = vsub.s32 %v885, %v983
    %v985 = vrot.slane %v601, %v984
    %v986 = vlaneseq
    %v987 = vshrl.u32 %v986, 7
    %v988 = vsub.s32 %v885, %v987
    %v989 = vrot.slane %v602, %v988
    %v990 = vlaneseq
    %v991 = vshrl.u32 %v990, 7
    %v992 = vsub.s32 %v885, %v991
    %v993 = vrot.slane %v603, %v992
    %v994 = vlaneseq
    %v995 = vshrl.u32 %v994, 7
    %v996 = vsub.s32 %v885, %v995
    %v997 = vrot.slane %v604, %v996
    %v998 = vlaneseq
    %v999 = vshrl.u32 %v998, 7
    %v1000 = vsub.s32 %v885, %v999
    %v1001 = vrot.slane %v605, %v1000
    %v1002 = vlaneseq
    %v1003 = vshrl.u32 %v1002, 7
    %v1004 = vsub.s32 %v885, %v1003
    %v1005 = vrot.slane %v606, %v1004
    %v1006 = vlaneseq
    %v1007 = vshrl.u32 %v1006, 7
    %v1008 = vsub.s32 %v885, %v1007
    %v1009 = vrot.slane %v607, %v1008
    %v1010 = vlaneseq
    %v1011 = vshrl.u32 %v1010, 7
    %v1012 = vsub.s32 %v885, %v1011
    %v1013 = vrot.slane %v608, %v1012
    %v1014 = vlaneseq
    %v1015 = vshrl.u32 %v1014, 7
    %v1016 = vsub.s32 %v885, %v1015
    %v1017 = vrot.slane %v609, %v1016
    %v1018 = vlaneseq
    %v1019 = vshrl.u32 %v1018, 7
    %v1020 = vsub.s32 %v885, %v1019
    %v1021 = vrot.slane %v610, %v1020
    %v1022 = vlaneseq
    %v1023 = vshrl.u32 %v1022, 7
    %v1024 = vsub.s32 %v885, %v1023
    %v1025 = vrot.slane %v611, %v1024
    %v1026 = vlaneseq
    %v1027 = vshrl.u32 %v1026, 7
    %v1028 = vsub.s32 %v885, %v1027
    %v1029 = vrot.slane %v612, %v1028
    %v1030 = vlaneseq
    %v1031 = vshrl.u32 %v1030, 7
    %v1032 = vsub.s32 %v885, %v1031
    %v1033 = vrot.slane %v613, %v1032
    %v1034 = vlaneseq
    %v1035 = vshrl.u32 %v1034, 7
    %v1036 = vsub.s32 %v885, %v1035
    %v1037 = vrot.slane %v614, %v1036
    %v1038 = vlaneseq
    %v1039 = vshrl.u32 %v1038, 7
    %v1040 = vsub.s32 %v885, %v1039
    %v1041 = vrot.slane %v615, %v1040
    %v1042 = vlaneseq
    %v1043 = vshrl.u32 %v1042, 7
    %v1044 = vsub.s32 %v885, %v1043
    %v1045 = vrot.slane %v616, %v1044
    %v1046 = vlaneseq
    %v1047 = vshrl.u32 %v1046, 7
    %v1048 = vsub.s32 %v885, %v1047
    %v1049 = vrot.slane %v617, %v1048
    %v1050 = vlaneseq
    %v1051 = vshrl.u32 %v1050, 7
    %v1052 = vsub.s32 %v885, %v1051
    %v1053 = vrot.slane %v618, %v1052
    %v1054 = vlaneseq
    %v1055 = vshrl.u32 %v1054, 7
    %v1056 = vsub.s32 %v885, %v1055
    %v1057 = vrot.slane %v619, %v1056
    %v1058 = vlaneseq
    %v1059 = vshrl.u32 %v1058, 7
    %v1060 = vsub.s32 %v885, %v1059
    %v1061 = vrot.slane %v620, %v1060
    %v1062 = vlaneseq
    %v1063 = vshrl.u32 %v1062, 7
    %v1064 = vsub.s32 %v885, %v1063
    %v1065 = vrot.slane %v621, %v1064
    %v1066 = vlaneseq
    %v1067 = vshrl.u32 %v1066, 7
    %v1068 = vsub.s32 %v885, %v1067
    %v1069 = vrot.slane %v622, %v1068
    %v1070 = vlaneseq
    %v1071 = vshrl.u32 %v1070, 7
    %v1072 = vsub.s32 %v885, %v1071
    %v1073 = vrot.slane %v623, %v1072
    %v1074 = vlaneseq
    %v1075 = vshrl.u32 %v1074, 7
    %v1076 = vsub.s32 %v885, %v1075
    %v1077 = vrot.slane %v624, %v1076
    %v1078 = vlaneseq
    %v1079 = vshrl.u32 %v1078, 7
    %v1080 = vsub.s32 %v885, %v1079
    %v1081 = vrot.slane %v625, %v1080
    %v1082 = vlaneseq
    %v1083 = vshrl.u32 %v1082, 7
    %v1084 = vsub.s32 %v885, %v1083
    %v1085 = vrot.slane %v626, %v1084
    %v1086 = vlaneseq
    %v1087 = vshrl.u32 %v1086, 7
    %v1088 = vsub.s32 %v885, %v1087
    %v1089 = vrot.slane %v627, %v1088
    %v1090 = vlaneseq
    %v1091 = vshrl.u32 %v1090, 7
    %v1092 = vsub.s32 %v885, %v1091
    %v1093 = vrot.slane %v628, %v1092
    %v1094 = vlaneseq
    %v1095 = vshrl.u32 %v1094, 7
    %v1096 = vsub.s32 %v885, %v1095
    %v1097 = vrot.slane %v629, %v1096
    %v1098 = vlaneseq
    %v1099 = vshrl.u32 %v1098, 7
    %v1100 = vsub.s32 %v885, %v1099
    %v1101 = vrot.slane %v630, %v1100
    %v1102 = vlaneseq
    %v1103 = vshrl.u32 %v1102, 7
    %v1104 = vsub.s32 %v885, %v1103
    %v1105 = vrot.slane %v631, %v1104
    %v1106 = vlaneseq
    %v1107 = vshrl.u32 %v1106, 7
    %v1108 = vsub.s32 %v885, %v1107
    %v1109 = vrot.slane %v632, %v1108
    %v1110 = vlaneseq
    %v1111 = vshrl.u32 %v1110, 7
    %v1112 = vsub.s32 %v885, %v1111
    %v1113 = vrot.slane %v633, %v1112
    %v1114 = vlaneseq
    %v1115 = vshrl.u32 %v1114, 7
    %v1116 = vsub.s32 %v885, %v1115
    %v1117 = vrot.slane %v634, %v1116
    %v1118 = vlaneseq
    %v1119 = vshrl.u32 %v1118, 7
    %v1120 = vsub.s32 %v885, %v1119
    %v1121 = vrot.slane %v635, %v1120
    %v1122 = vlaneseq
    %v1123 = vshrl.u32 %v1122, 7
    %v1124 = vsub.s32 %v885, %v1123
    %v1125 = vrot.slane %v636, %v1124
    %v1126 = vlaneseq
    %v1127 = vshrl.u32 %v1126, 7
    %v1128 = vsub.s32 %v885, %v1127
    %v1129 = vrot.slane %v637, %v1128
    %v1130 = vlaneseq
    %v1131 = vshrl.u32 %v1130, 7
    %v1132 = vsub.s32 %v885, %v1131
    %v1133 = vrot.slane %v638, %v1132
    %v1134 = vlaneseq
    %v1135 = vshrl.u32 %v1134, 7
    %v1136 = vsub.s32 %v885, %v1135
    %v1137 = vrot.slane %v639, %v1136
    %v1138 = vlaneseq
    %v1139 = vshrl.u32 %v1138, 7
    %v1140 = vsub.s32 %v885, %v1139
    %v1141 = vrot.slane %v640, %v1140
    %v1142 = vlaneseq
    %v1143 = vshrl.u32 %v1142, 7
    %v1144 = vsub.s32 %v885, %v1143
    %v1145 = vrot.slane %v641, %v1144
    %v1146 = vlaneseq
    %v1147 = vshrl.u32 %v1146, 7
    %v1148 = vsub.s32 %v885, %v1147
    %v1149 = vrot.slane %v642, %v1148
    %v1150 = vlaneseq
    %v1151 = vshrl.u32 %v1150, 7
    %v1152 = vsub.s32 %v885, %v1151
    %v1153 = vrot.slane %v643, %v1152
    %v1154 = vlaneseq
    %v1155 = vshrl.u32 %v1154, 7
    %v1156 = vsub.s32 %v885, %v1155
    %v1157 = vrot.slane %v644, %v1156
    %v1158 = vlaneseq
    %v1159 = vshrl.u32 %v1158, 7
    %v1160 = vsub.s32 %v885, %v1159
    %v1161 = vrot.slane %v645, %v1160
    %v1162 = vlaneseq
    %v1163 = vshrl.u32 %v1162, 7
    %v1164 = vsub.s32 %v885, %v1163
    %v1165 = vrot.slane %v646, %v1164
    %v1166 = vlaneseq
    %v1167 = vshrl.u32 %v1166, 7
    %v1168 = vsub.s32 %v885, %v1167
    %v1169 = vrot.slane %v647, %v1168
    %v1170 = vlaneseq
    %v1171 = vshrl.u32 %v1170, 7
    %v1172 = vsub.s32 %v885, %v1171
    %v1173 = vrot.slane %v648, %v1172
    %v1174 = vlaneseq
    %v1175 = vshrl.u32 %v1174, 7
    %v1176 = vsub.s32 %v885, %v1175
    %v1177 = vrot.slane %v649, %v1176
    %v1178 = vlaneseq
    %v1179 = vshrl.u32 %v1178, 7
    %v1180 = vsub.s32 %v885, %v1179
    %v1181 = vrot.slane %v650, %v1180
    %v1182 = vlaneseq
    %v1183 = vshrl.u32 %v1182, 7
    %v1184 = vsub.s32 %v885, %v1183
    %v1185 = vrot.slane %v651, %v1184
    %v1186 = vlaneseq
    %v1187 = vshrl.u32 %v1186, 7
    %v1188 = vsub.s32 %v885, %v1187
    %v1189 = vrot.slane %v652, %v1188
    %v1190 = vlaneseq
    %v1191 = vshrl.u32 %v1190, 7
    %v1192 = vsub.s32 %v885, %v1191
    %v1193 = vrot.slane %v653, %v1192
    %v1194 = vlaneseq
    %v1195 = vshrl.u32 %v1194, 7
    %v1196 = vsub.s32 %v885, %v1195
    %v1197 = vrot.slane %v654, %v1196
    %v1198 = vlaneseq
    %v1199 = vshrl.u32 %v1198, 7
    %v1200 = vsub.s32 %v885, %v1199
    %v1201 = vrot.slane %v655, %v1200
    %v1202 = vlaneseq
    %v1203 = vshrl.u32 %v1202, 7
    %v1204 = vsub.s32 %v885, %v1203
    %v1205 = vrot.slane %v656, %v1204
    %v1206 = vlaneseq
    %v1207 = vshrl.u32 %v1206, 7
    %v1208 = vsub.s32 %v885, %v1207
    %v1209 = vrot.slane %v657, %v1208
    %v1210 = vlaneseq
    %v1211 = vshrl.u32 %v1210, 7
    %v1212 = vsub.s32 %v885, %v1211
    %v1213 = vrot.slane %v658, %v1212
    %v1214 = vlaneseq
    %v1215 = vshrl.u32 %v1214, 7
    %v1216 = vsub.s32 %v885, %v1215
    %v1217 = vrot.slane %v659, %v1216
    %v1218 = vlaneseq
    %v1219 = vshrl.u32 %v1218, 7
    %v1220 = vsub.s32 %v885, %v1219
    %v1221 = vrot.slane %v660, %v1220
    %v1222 = vlaneseq
    %v1223 = vshrl.u32 %v1222, 7
    %v1224 = vsub.s32 %v885, %v1223
    %v1225 = vrot.slane %v661, %v1224
    %v1226 = vlaneseq
    %v1227 = vshrl.u32 %v1226, 7
    %v1228 = vsub.s32 %v885, %v1227
    %v1229 = vrot.slane %v662, %v1228
    %v1230 = vlaneseq
    %v1231 = vshrl.u32 %v1230, 7
    %v1232 = vsub.s32 %v885, %v1231
    %v1233 = vrot.slane %v663, %v1232
    %v1234 = vlaneseq
    %v1235 = vshrl.u32 %v1234, 7
    %v1236 = vsub.s32 %v885, %v1235
    %v1237 = vrot.slane %v664, %v1236
    %v1238 = vlaneseq
    %v1239 = vshrl.u32 %v1238, 7
    %v1240 = vsub.s32 %v885, %v1239
    %v1241 = vrot.slane %v665, %v1240
    %v1242 = vlaneseq
    %v1243 = vshrl.u32 %v1242, 7
    %v1244 = vsub.s32 %v885, %v1243
    %v1245 = vrot.slane %v666, %v1244
    %v1246 = vlaneseq
    %v1247 = vshrl.u32 %v1246, 7
    %v1248 = vsub.s32 %v885, %v1247
    %v1249 = vrot.slane %v667, %v1248
    %v1250 = vlaneseq
    %v1251 = vshrl.u32 %v1250, 7
    %v1252 = vsub.s32 %v885, %v1251
    %v1253 = vrot.slane %v668, %v1252
    %v1254 = vlaneseq
    %v1255 = vshrl.u32 %v1254, 7
    %v1256 = vsub.s32 %v885, %v1255
    %v1257 = vrot.slane %v669, %v1256
    %v1258 = vlaneseq
    %v1259 = vshrl.u32 %v1258, 7
    %v1260 = vsub.s32 %v885, %v1259
    %v1261 = vrot.slane %v670, %v1260
    %v1262 = vlaneseq
    %v1263 = vshrl.u32 %v1262, 7
    %v1264 = vsub.s32 %v885, %v1263
    %v1265 = vrot.slane %v671, %v1264
    %v1266 = vlaneseq
    %v1267 = vshrl.u32 %v1266, 7
    %v1268 = vsub.s32 %v885, %v1267
    %v1269 = vrot.slane %v672, %v1268
    %v1270 = vlaneseq
    %v1271 = vshrl.u32 %v1270, 7
    %v1272 = vsub.s32 %v885, %v1271
    %v1273 = vrot.slane %v673, %v1272
    %v1274 = vlaneseq
    %v1275 = vshrl.u32 %v1274, 7
    %v1276 = vsub.s32 %v885, %v1275
    %v1277 = vrot.slane %v674, %v1276
    %v1278 = vlaneseq
    %v1279 = vshrl.u32 %v1278, 7
    %v1280 = vsub.s32 %v885, %v1279
    %v1281 = vrot.slane %v675, %v1280
    %v1282 = vlaneseq
    %v1283 = vshrl.u32 %v1282, 7
    %v1284 = vsub.s32 %v885, %v1283
    %v1285 = vrot.slane %v676, %v1284
    %v1286 = vlaneseq
    %v1287 = vshrl.u32 %v1286, 7
    %v1288 = vsub.s32 %v885, %v1287
    %v1289 = vrot.slane %v677, %v1288
    %v1290 = vlaneseq
    %v1291 = vshrl.u32 %v1290, 7
    %v1292 = vsub.s32 %v885, %v1291
    %v1293 = vrot.slane %v678, %v1292
    %v1294 = vlaneseq
    %v1295 = vshrl.u32 %v1294, 7
    %v1296 = vsub.s32 %v885, %v1295
    %v1297 = vrot.slane %v679, %v1296
    %v1298 = vlaneseq
    %v1299 = vshrl.u32 %v1298, 7
    %v1300 = vsub.s32 %v885, %v1299
    %v1301 = vrot.slane %v680, %v1300
    %v1302 = vlaneseq
    %v1303 = vshrl.u32 %v1302, 7
    %v1304 = vsub.s32 %v885, %v1303
    %v1305 = vrot.slane %v681, %v1304
    %v1306 = vlaneseq
    %v1307 = vshrl.u32 %v1306, 7
    %v1308 = vsub.s32 %v885, %v1307
    %v1309 = vrot.slane %v682, %v1308
    %v1310 = vlaneseq
    %v1311 = vshrl.u32 %v1310, 7
    %v1312 = vsub.s32 %v885, %v1311
    %v1313 = vrot.slane %v683, %v1312
    %v1314 = vlaneseq
    %v1315 = vshrl.u32 %v1314, 7
    %v1316 = vsub.s32 %v885, %v1315
    %v1317 = vrot.slane %v684, %v1316
    %v1318 = vlaneseq
    %v1319 = vshrl.u32 %v1318, 7
    %v1320 = vsub.s32 %v885, %v1319
    %v1321 = vrot.slane %v685, %v1320
    %v1322 = vlaneseq
    %v1323 = vshrl.u32 %v1322, 7
    %v1324 = vsub.s32 %v885, %v1323
    %v1325 = vrot.slane %v686, %v1324
    %v1326 = vlaneseq
    %v1327 = vshrl.u32 %v1326, 7
    %v1328 = vsub.s32 %v885, %v1327
    %v1329 = vrot.slane %v687, %v1328
    %v1330 = vlaneseq
    %v1331 = vshrl.u32 %v1330, 7
    %v1332 = vsub.s32 %v885, %v1331
    %v1333 = vrot.slane %v688, %v1332
    %v1334 = vlaneseq
    %v1335 = vshrl.u32 %v1334, 7
    %v1336 = vsub.s32 %v885, %v1335
    %v1337 = vrot.slane %v689, %v1336
    %v1338 = vlaneseq
    %v1339 = vshrl.u32 %v1338, 7
    %v1340 = vsub.s32 %v885, %v1339
    %v1341 = vrot.slane %v690, %v1340
    %v1342 = vlaneseq
    %v1343 = vshrl.u32 %v1342, 7
    %v1344 = vsub.s32 %v885, %v1343
    %v1345 = vrot.slane %v691, %v1344
    %v1346 = vlaneseq
    %v1347 = vshrl.u32 %v1346, 7
    %v1348 = vsub.s32 %v885, %v1347
    %v1349 = vrot.slane %v692, %v1348
    %v1350 = vlaneseq
    %v1351 = vshrl.u32 %v1350, 7
    %v1352 = vsub.s32 %v885, %v1351
    %v1353 = vrot.slane %v693, %v1352
    %v1354 = vlaneseq
    %v1355 = vshrl.u32 %v1354, 7
    %v1356 = vsub.s32 %v885, %v1355
    %v1357 = vrot.slane %v694, %v1356
    %v1358 = vlaneseq
    %v1359 = vshrl.u32 %v1358, 7
    %v1360 = vsub.s32 %v885, %v1359
    %v1361 = vrot.slane %v695, %v1360
    %v1362 = vlaneseq
    %v1363 = vshrl.u32 %v1362, 7
    %v1364 = vsub.s32 %v885, %v1363
    %v1365 = vrot.slane %v696, %v1364
    %v1366 = vlaneseq
    %v1367 = vshrl.u32 %v1366, 7
    %v1368 = vsub.s32 %v885, %v1367
    %v1369 = vrot.slane %v697, %v1368
    %v1370 = vlaneseq
    %v1371 = vshrl.u32 %v1370, 7
    %v1372 = vsub.s32 %v885, %v1371
    %v1373 = vrot.slane %v698, %v1372
    %v1374 = vlaneseq
    %v1375 = vshrl.u32 %v1374, 7
    %v1376 = vsub.s32 %v885, %v1375
    %v1377 = vrot.slane %v699, %v1376
    %v1378 = vlaneseq
    %v1379 = vshrl.u32 %v1378, 7
    %v1380 = vsub.s32 %v885, %v1379
    %v1381 = vrot.slane %v700, %v1380
    %v1382 = vlaneseq
    %v1383 = vshrl.u32 %v1382, 7
    %v1384 = vsub.s32 %v885, %v1383
    %v1385 = vrot.slane %v701, %v1384
    %v1386 = vlaneseq
    %v1387 = vshrl.u32 %v1386, 7
    %v1388 = vsub.s32 %v885, %v1387
    %v1389 = vrot.slane %v702, %v1388
    %v1390 = vlaneseq
    %v1391 = vshrl.u32 %v1390, 7
    %v1392 = vsub.s32 %v885, %v1391
    %v1393 = vrot.slane %v703, %v1392
    %v1394 = vlaneseq
    %v1395 = vshrl.u32 %v1394, 7
    %v1396 = vsub.s32 %v885, %v1395
    %v1397 = vrot.slane %v704, %v1396
    %vm1398 = vcmask 1041409
    %v1399 = vsel %vm1398, %v893, %v889
    %vm1400 = vcmask 1042434
    %v1401 = vsel %vm1400, %v897, %v1399
    %vm1402 = vcmask 1043459
    %v1403 = vsel %vm1402, %v901, %v1401
    %vm1404 = vcmask 1044484
    %v1405 = vsel %vm1404, %v905, %v1403
    %vm1406 = vcmask 1045509
    %v1407 = vsel %vm1406, %v909, %v1405
    %vm1408 = vcmask 1046534
    %v1409 = vsel %vm1408, %v913, %v1407
    %vm1410 = vcmask 1047559
    %v1411 = vsel %vm1410, %v917, %v1409
    %v1412 = vsel %vm1398, %v925, %v921
    %v1413 = vsel %vm1400, %v929, %v1412
    %v1414 = vsel %vm1402, %v933, %v1413
    %v1415 = vsel %vm1404, %v937, %v1414
    %v1416 = vsel %vm1406, %v941, %v1415
    %v1417 = vsel %vm1408, %v945, %v1416
    %v1418 = vsel %vm1410, %v949, %v1417
    %v1419 = vsel %vm1398, %v957, %v953
    %v1420 = vsel %vm1400, %v961, %v1419
    %v1421 = vsel %vm1402, %v965, %v1420
    %v1422 = vsel %vm1404, %v969, %v1421
    %v1423 = vsel %vm1406, %v973, %v1422
    %v1424 = vsel %vm1408, %v977, %v1423
    %v1425 = vsel %vm1410, %v981, %v1424
    %v1426 = vsel %vm1398, %v989, %v985
    %v1427 = vsel %vm1400, %v993, %v1426
    %v1428 = vsel %vm1402, %v997, %v1427
    %v1429 = vsel %vm1404, %v1001, %v1428
    %v1430 = vsel %vm1406, %v1005, %v1429
    %v1431 = vsel %vm1408, %v1009, %v1430
    %v1432 = vsel %vm1410, %v1013, %v1431
    %v1433 = vsel %vm1398, %v1021, %v1017
    %v1434 = vsel %vm1400, %v1025, %v1433
    %v1435 = vsel %vm1402, %v1029, %v1434
    %v1436 = vsel %vm1404, %v1033, %v1435
    %v1437 = vsel %vm1406, %v1037, %v1436
    %v1438 = vsel %vm1408, %v1041, %v1437
    %v1439 = vsel %vm1410, %v1045, %v1438
    %v1440 = vsel %vm1398, %v1053, %v1049
    %v1441 = vsel %vm1400, %v1057, %v1440
    %v1442 = vsel %vm1402, %v1061, %v1441
    %v1443 = vsel %vm1404, %v1065, %v1442
    %v1444 = vsel %vm1406, %v1069, %v1443
    %v1445 = vsel %vm1408, %v1073, %v1444
    %v1446 = vsel %vm1410, %v1077, %v1445
    %v1447 = vsel %vm1398, %v1085, %v1081
    %v1448 = vsel %vm1400, %v1089, %v1447
    %v1449 = vsel %vm1402, %v1093, %v1448
    %v1450 = vsel %vm1404, %v1097, %v1449
    %v1451 = vsel %vm1406, %v1101, %v1450
    %v1452 = vsel %vm1408, %v1105, %v1451
    %v1453 = vsel %vm1410, %v1109, %v1452
    %v1454 = vsel %vm1398, %v1117, %v1113
    %v1455 = vsel %vm1400, %v1121, %v1454
    %v1456 = vsel %vm1402, %v1125, %v1455
    %v1457 = vsel %vm1404, %v1129, %v1456
    %v1458 = vsel %vm1406, %v1133, %v1457
    %v1459 = vsel %vm1408, %v1137, %v1458
    %v1460 = vsel %vm1410, %v1141, %v1459
    %v1461 = vsel %vm1398, %v1149, %v1145
    %v1462 = vsel %vm1400, %v1153, %v1461
    %v1463 = vsel %vm1402, %v1157, %v1462
    %v1464 = vsel %vm1404, %v1161, %v1463
    %v1465 = vsel %vm1406, %v1165, %v1464
    %v1466 = vsel %vm1408, %v1169, %v1465
    %v1467 = vsel %vm1410, %v1173, %v1466
    %v1468 = vsel %vm1398, %v1181, %v1177
    %v1469 = vsel %vm1400, %v1185, %v1468
    %v1470 = vsel %vm1402, %v1189, %v1469
    %v1471 = vsel %vm1404, %v1193, %v1470
    %v1472 = vsel %vm1406, %v1197, %v1471
    %v1473 = vsel %vm1408, %v1201, %v1472
    %v1474 = vsel %vm1410, %v1205, %v1473
    %v1475 = vsel %vm1398, %v1213, %v1209
    %v1476 = vsel %vm1400, %v1217, %v1475
    %v1477 = vsel %vm1402, %v1221, %v1476
    %v1478 = vsel %vm1404, %v1225, %v1477
    %v1479 = vsel %vm1406, %v1229, %v1478
    %v1480 = vsel %vm1408, %v1233, %v1479
    %v1481 = vsel %vm1410, %v1237, %v1480
    %v1482 = vsel %vm1398, %v1245, %v1241
    %v1483 = vsel %vm1400, %v1249, %v1482
    %v1484 = vsel %vm1402, %v1253, %v1483
    %v1485 = vsel %vm1404, %v1257, %v1484
    %v1486 = vsel %vm1406, %v1261, %v1485
    %v1487 = vsel %vm1408, %v1265, %v1486
    %v1488 = vsel %vm1410, %v1269, %v1487
    %v1489 = vsel %vm1398, %v1277, %v1273
    %v1490 = vsel %vm1400, %v1281, %v1489
    %v1491 = vsel %vm1402, %v1285, %v1490
    %v1492 = vsel %vm1404, %v1289, %v1491
    %v1493 = vsel %vm1406, %v1293, %v1492
    %v1494 = vsel %vm1408, %v1297, %v1493
    %v1495 = vsel %vm1410, %v1301, %v1494
    %v1496 = vsel %vm1398, %v1309, %v1305
    %v1497 = vsel %vm1400, %v1313, %v1496
    %v1498 = vsel %vm1402, %v1317, %v1497
    %v1499 = vsel %vm1404, %v1321, %v1498
    %v1500 = vsel %vm1406, %v1325, %v1499
    %v1501 = vsel %vm1408, %v1329, %v1500
    %v1502 = vsel %vm1410, %v1333, %v1501
    %v1503 = vsel %vm1398, %v1341, %v1337
    %v1504 = vsel %vm1400, %v1345, %v1503
    %v1505 = vsel %vm1402, %v1349, %v1504
    %v1506 = vsel %vm1404, %v1353, %v1505
    %v1507 = vsel %vm1406, %v1357, %v1506
    %v1508 = vsel %vm1408, %v1361, %v1507
    %v1509 = vsel %vm1410, %v1365, %v1508
    %v1510 = vsel %vm1398, %v1373, %v1369
    %v1511 = vsel %vm1400, %v1377, %v1510
    %v1512 = vsel %vm1402, %v1381, %v1511
    %v1513 = vsel %vm1404, %v1385, %v1512
    %v1514 = vsel %vm1406, %v1389, %v1513
    %v1515 = vsel %vm1408, %v1393, %v1514
    %v1516 = vsel %vm1410, %v1397, %v1515
    %v1533 = vsel %vm740, %v1411, -inf
    %v1534 = vsel %vm741, %v1418, -inf
    %v1535 = vsel %vm742, %v1425, -inf
    %v1536 = vsel %vm743, %v1432, -inf
    %v1537 = vsel %vm744, %v1439, -inf
    %v1538 = vsel %vm745, %v1446, -inf
    %v1539 = vsel %vm746, %v1453, -inf
    %v1540 = vsel %vm747, %v1460, -inf
    %v1541 = vsel %vm748, %v1467, -inf
    %v1542 = vsel %vm749, %v1474, -inf
    %v1543 = vsel %vm750, %v1481, -inf
    %v1544 = vsel %vm751, %v1488, -inf
    %v1545 = vsel %vm752, %v1495, -inf
    %v1546 = vsel %vm753, %v1502, -inf
    %v1547 = vsel %vm754, %v1509, -inf
    %v1548 = vsel %vm755, %v1516, -inf
    %1549 = vxpose.xlu0.b32.start [1/16] %v1533, 128
    %1550 = vxpose.xlu0.b32.cont [2/16] %v1534, 128
    %1551 = vxpose.xlu0.b32.cont [3/16] %v1535, 128
    %1552 = vxpose.xlu0.b32.cont [4/16] %v1536, 128
    %1553 = vxpose.xlu0.b32.cont [5/16] %v1537, 128
    %1554 = vxpose.xlu0.b32.cont [6/16] %v1538, 128
    %1555 = vxpose.xlu0.b32.cont [7/16] %v1539, 128
    %1556 = vxpose.xlu0.b32.cont [8/16] %v1540, 128
    %1557 = vxpose.xlu0.b32.cont [9/16] %v1541, 128
    %1558 = vxpose.xlu0.b32.cont [10/16] %v1542, 128
    %1559 = vxpose.xlu0.b32.cont [11/16] %v1543, 128
    %1560 = vxpose.xlu0.b32.cont [12/16] %v1544, 128
    %1561 = vxpose.xlu0.b32.cont [13/16] %v1545, 128
    %1562 = vxpose.xlu0.b32.cont [14/16] %v1546, 128
    %1563 = vxpose.xlu0.b32.cont [15/16] %v1547, 128
    %1564 = vxpose.xlu0.b32.end [16/16] %v1548, 128
    %v1565 = vpop.trf.xlu0
    %v1566 = vpop.trf.xlu0
    %v1567 = vpop.trf.xlu0
    %v1568 = vpop.trf.xlu0
    %v1569 = vpop.trf.xlu0
    %v1570 = vpop.trf.xlu0
    %v1571 = vpop.trf.xlu0
    %v1572 = vpop.trf.xlu0
    %v1573 = vpop.trf.xlu0
    %v1574 = vpop.trf.xlu0
    %v1575 = vpop.trf.xlu0
    %v1576 = vpop.trf.xlu0
    %v1577 = vpop.trf.xlu0
    %v1578 = vpop.trf.xlu0
    %v1579 = vpop.trf.xlu0
    %v1580 = vpop.trf.xlu0
    %s1581 = sshra.s32 %s705, 7
    %s1582 = sand.u32 %s705, 127
    %s1583 = scalar_lea.vmem [#allocation2], %s1581
    %1584 = vst [vmem:[%s1583] sm:$0xff] %v1565
    %v1585 = vld [vmem:[#allocation3] sm:$0xff]
    %1586 = vmax.xlane.f32.xlu0 %v1565
    %v1587 = vpop.xlane.xlu0 %1586
    %v1588 = vmax.f32 %v1585, %v1587
    %v1589 = vsub.f32 %v1585, %v1588
    %v1590 = vmul.f32 %v1589, 1.442695
    %v1591 = vpow.pop %v1590
    %1592 = vxpose.xlu0.b32.start [1/16] %v1588, 128
    %1593 = vxpose.xlu0.b32.cont [2/16] 0.0, 128
    %1594 = vxpose.xlu0.b32.cont [3/16] 0.0, 128
    %1595 = vxpose.xlu0.b32.cont [4/16] 0.0, 128
    %1596 = vxpose.xlu0.b32.cont [5/16] 0.0, 128
    %1597 = vxpose.xlu0.b32.cont [6/16] 0.0, 128
    %1598 = vxpose.xlu0.b32.cont [7/16] 0.0, 128
    %1599 = vxpose.xlu0.b32.cont [8/16] 0.0, 128
    %1600 = vxpose.xlu0.b32.cont [9/16] 0.0, 128
    %1601 = vxpose.xlu0.b32.cont [10/16] 0.0, 128
    %1602 = vxpose.xlu0.b32.cont [11/16] 0.0, 128
    %1603 = vxpose.xlu0.b32.cont [12/16] 0.0, 128
    %1604 = vxpose.xlu0.b32.cont [13/16] 0.0, 128
    %1605 = vxpose.xlu0.b32.cont [14/16] 0.0, 128
    %1606 = vxpose.xlu0.b32.cont [15/16] 0.0, 128
    %1607 = vxpose.xlu0.b32.end [16/16] 0.0, 128
    %v1608 = vpop.trf.xlu0
    %v1609 = vpop.trf.xlu0
    %v1610 = vpop.trf.xlu0
    %v1611 = vpop.trf.xlu0
    %v1612 = vpop.trf.xlu0
    %v1613 = vpop.trf.xlu0
    %v1614 = vpop.trf.xlu0
    %v1615 = vpop.trf.xlu0
    %v1616 = vpop.trf.xlu0
    %v1617 = vpop.trf.xlu0
    %v1618 = vpop.trf.xlu0
    %v1619 = vpop.trf.xlu0
    %v1620 = vpop.trf.xlu0
    %v1621 = vpop.trf.xlu0
    %v1622 = vpop.trf.xlu0
    %v1623 = vpop.trf.xlu0
    %v1624 = vlaneseq
    %v1625 = vshrl.u32 %v1624, 7
    %v1626 = vsub.s32 0, %v1625
    %v1627 = vrot.slane %v1608, %v1626
    %v1628 = vsub.f32 %v1533, %v1627
    %v1629 = vsub.f32 %v1534, %v1627
    %v1630 = vsub.f32 %v1535, %v1627
    %v1631 = vsub.f32 %v1536, %v1627
    %v1632 = vsub.f32 %v1537, %v1627
    %v1633 = vsub.f32 %v1538, %v1627
    %v1634 = vsub.f32 %v1539, %v1627
    %v1635 = vsub.f32 %v1540, %v1627
    %v1636 = vsub.f32 %v1541, %v1627
    %v1637 = vsub.f32 %v1542, %v1627
    %v1638 = vsub.f32 %v1543, %v1627
    %v1639 = vsub.f32 %v1544, %v1627
    %v1640 = vsub.f32 %v1545, %v1627
    %v1641 = vsub.f32 %v1546, %v1627
    %v1642 = vsub.f32 %v1547, %v1627
    %v1643 = vsub.f32 %v1548, %v1627
    %v1644 = vmul.f32 %v1628, 1.442695
    %v1645 = vpow.pop %v1644
    %v1646 = vmul.f32 %v1629, 1.442695
    %v1647 = vpow.pop %v1646
    %v1648 = vmul.f32 %v1630, 1.442695
    %v1649 = vpow.pop %v1648
    %v1650 = vmul.f32 %v1631, 1.442695
    %v1651 = vpow.pop %v1650
    %v1652 = vmul.f32 %v1632, 1.442695
    %v1653 = vpow.pop %v1652
    %v1654 = vmul.f32 %v1633, 1.442695
    %v1655 = vpow.pop %v1654
    %v1656 = vmul.f32 %v1634, 1.442695
    %v1657 = vpow.pop %v1656
    %v1658 = vmul.f32 %v1635, 1.442695
    %v1659 = vpow.pop %v1658
    %v1660 = vmul.f32 %v1636, 1.442695
    %v1661 = vpow.pop %v1660
    %v1662 = vmul.f32 %v1637, 1.442695
    %v1663 = vpow.pop %v1662
    %v1664 = vmul.f32 %v1638, 1.442695
    %v1665 = vpow.pop %v1664
    %v1666 = vmul.f32 %v1639, 1.442695
    %v1667 = vpow.pop %v1666
    %v1668 = vmul.f32 %v1640, 1.442695
    %v1669 = vpow.pop %v1668
    %v1670 = vmul.f32 %v1641, 1.442695
    %v1671 = vpow.pop %v1670
    %v1672 = vmul.f32 %v1642, 1.442695
    %v1673 = vpow.pop %v1672
    %v1674 = vmul.f32 %v1643, 1.442695
    %v1675 = vpow.pop %v1674
    %v1676 = vld [vmem:[#allocation10] sm:$0xff]
    %v1677 = vld [vmem:[#allocation10 + $0x8] sm:$0xff]
    %v1678 = vld [vmem:[#allocation10 + $0x10] sm:$0xff]
    %v1679 = vld [vmem:[#allocation10 + $0x18] sm:$0xff]
    %v1680 = vld [vmem:[#allocation10 + $0x20] sm:$0xff]
    %v1681 = vld [vmem:[#allocation10 + $0x28] sm:$0xff]
    %v1682 = vld [vmem:[#allocation10 + $0x30] sm:$0xff]
    %v1683 = vld [vmem:[#allocation10 + $0x38] sm:$0xff]
    %v1684 = vld [vmem:[#allocation10 + $0x40] sm:$0xff]
    %v1685 = vld [vmem:[#allocation10 + $0x48] sm:$0xff]
    %v1686 = vld [vmem:[#allocation10 + $0x50] sm:$0xff]
    %v1687 = vld [vmem:[#allocation10 + $0x58] sm:$0xff]
    %v1688 = vld [vmem:[#allocation10 + $0x60] sm:$0xff]
    %v1689 = vld [vmem:[#allocation10 + $0x68] sm:$0xff]
    %v1690 = vld [vmem:[#allocation10 + $0x70] sm:$0xff]
    %v1691 = vld [vmem:[#allocation10 + $0x78] sm:$0xff]
    %v1692 = vld [vmem:[#allocation10 + $0x80] sm:$0xff]
    %v1693 = vld [vmem:[#allocation10 + $0x88] sm:$0xff]
    %v1694 = vld [vmem:[#allocation10 + $0x90] sm:$0xff]
    %v1695 = vld [vmem:[#allocation10 + $0x98] sm:$0xff]
    %v1696 = vld [vmem:[#allocation10 + $0xa0] sm:$0xff]
    %v1697 = vld [vmem:[#allocation10 + $0xa8] sm:$0xff]
    %v1698 = vld [vmem:[#allocation10 + $0xb0] sm:$0xff]
    %v1699 = vld [vmem:[#allocation10 + $0xb8] sm:$0xff]
    %v1700 = vld [vmem:[#allocation10 + $0xc0] sm:$0xff]
    %v1701 = vld [vmem:[#allocation10 + $0xc8] sm:$0xff]
    %v1702 = vld [vmem:[#allocation10 + $0xd0] sm:$0xff]
    %v1703 = vld [vmem:[#allocation10 + $0xd8] sm:$0xff]
    %v1704 = vld [vmem:[#allocation10 + $0xe0] sm:$0xff]
    %v1705 = vld [vmem:[#allocation10 + $0xe8] sm:$0xff]
    %v1706 = vld [vmem:[#allocation10 + $0xf0] sm:$0xff]
    %v1707 = vld [vmem:[#allocation10 + $0xf8] sm:$0xff]
    %v1708 = vld [vmem:[#allocation10 + $0x100] sm:$0xff]
    %v1709 = vld [vmem:[#allocation10 + $0x108] sm:$0xff]
    %v1710 = vld [vmem:[#allocation10 + $0x110] sm:$0xff]
    %v1711 = vld [vmem:[#allocation10 + $0x118] sm:$0xff]
    %v1712 = vld [vmem:[#allocation10 + $0x120] sm:$0xff]
    %v1713 = vld [vmem:[#allocation10 + $0x128] sm:$0xff]
    %v1714 = vld [vmem:[#allocation10 + $0x130] sm:$0xff]
    %v1715 = vld [vmem:[#allocation10 + $0x138] sm:$0xff]
    %v1716 = vld [vmem:[#allocation10 + $0x140] sm:$0xff]
    %v1717 = vld [vmem:[#allocation10 + $0x148] sm:$0xff]
    %v1718 = vld [vmem:[#allocation10 + $0x150] sm:$0xff]
    %v1719 = vld [vmem:[#allocation10 + $0x158] sm:$0xff]
    %v1720 = vld [vmem:[#allocation10 + $0x160] sm:$0xff]
    %v1721 = vld [vmem:[#allocation10 + $0x168] sm:$0xff]
    %v1722 = vld [vmem:[#allocation10 + $0x170] sm:$0xff]
    %v1723 = vld [vmem:[#allocation10 + $0x178] sm:$0xff]
    %v1724 = vld [vmem:[#allocation10 + $0x180] sm:$0xff]
    %v1725 = vld [vmem:[#allocation10 + $0x188] sm:$0xff]
    %v1726 = vld [vmem:[#allocation10 + $0x190] sm:$0xff]
    %v1727 = vld [vmem:[#allocation10 + $0x198] sm:$0xff]
    %v1728 = vld [vmem:[#allocation10 + $0x1a0] sm:$0xff]
    %v1729 = vld [vmem:[#allocation10 + $0x1a8] sm:$0xff]
    %v1730 = vld [vmem:[#allocation10 + $0x1b0] sm:$0xff]
    %v1731 = vld [vmem:[#allocation10 + $0x1b8] sm:$0xff]
    %v1732 = vld [vmem:[#allocation10 + $0x1c0] sm:$0xff]
    %v1733 = vld [vmem:[#allocation10 + $0x1c8] sm:$0xff]
    %v1734 = vld [vmem:[#allocation10 + $0x1d0] sm:$0xff]
    %v1735 = vld [vmem:[#allocation10 + $0x1d8] sm:$0xff]
    %v1736 = vld [vmem:[#allocation10 + $0x1e0] sm:$0xff]
    %v1737 = vld [vmem:[#allocation10 + $0x1e8] sm:$0xff]
    %v1738 = vld [vmem:[#allocation10 + $0x1f0] sm:$0xff]
    %v1739 = vld [vmem:[#allocation10 + $0x1f8] sm:$0xff]
    %v1740 = vld [vmem:[#allocation10 + $0x200] sm:$0xff]
    %v1741 = vld [vmem:[#allocation10 + $0x208] sm:$0xff]
    %v1742 = vld [vmem:[#allocation10 + $0x210] sm:$0xff]
    %v1743 = vld [vmem:[#allocation10 + $0x218] sm:$0xff]
    %v1744 = vld [vmem:[#allocation10 + $0x220] sm:$0xff]
    %v1745 = vld [vmem:[#allocation10 + $0x228] sm:$0xff]
    %v1746 = vld [vmem:[#allocation10 + $0x230] sm:$0xff]
    %v1747 = vld [vmem:[#allocation10 + $0x238] sm:$0xff]
    %v1748 = vld [vmem:[#allocation10 + $0x240] sm:$0xff]
    %v1749 = vld [vmem:[#allocation10 + $0x248] sm:$0xff]
    %v1750 = vld [vmem:[#allocation10 + $0x250] sm:$0xff]
    %v1751 = vld [vmem:[#allocation10 + $0x258] sm:$0xff]
    %v1752 = vld [vmem:[#allocation10 + $0x260] sm:$0xff]
    %v1753 = vld [vmem:[#allocation10 + $0x268] sm:$0xff]
    %v1754 = vld [vmem:[#allocation10 + $0x270] sm:$0xff]
    %v1755 = vld [vmem:[#allocation10 + $0x278] sm:$0xff]
    %v1756 = vld [vmem:[#allocation10 + $0x280] sm:$0xff]
    %v1757 = vld [vmem:[#allocation10 + $0x288] sm:$0xff]
    %v1758 = vld [vmem:[#allocation10 + $0x290] sm:$0xff]
    %v1759 = vld [vmem:[#allocation10 + $0x298] sm:$0xff]
    %v1760 = vld [vmem:[#allocation10 + $0x2a0] sm:$0xff]
    %v1761 = vld [vmem:[#allocation10 + $0x2a8] sm:$0xff]
    %v1762 = vld [vmem:[#allocation10 + $0x2b0] sm:$0xff]
    %v1763 = vld [vmem:[#allocation10 + $0x2b8] sm:$0xff]
    %v1764 = vld [vmem:[#allocation10 + $0x2c0] sm:$0xff]
    %v1765 = vld [vmem:[#allocation10 + $0x2c8] sm:$0xff]
    %v1766 = vld [vmem:[#allocation10 + $0x2d0] sm:$0xff]
    %v1767 = vld [vmem:[#allocation10 + $0x2d8] sm:$0xff]
    %v1768 = vld [vmem:[#allocation10 + $0x2e0] sm:$0xff]
    %v1769 = vld [vmem:[#allocation10 + $0x2e8] sm:$0xff]
    %v1770 = vld [vmem:[#allocation10 + $0x2f0] sm:$0xff]
    %v1771 = vld [vmem:[#allocation10 + $0x2f8] sm:$0xff]
    %v1772 = vld [vmem:[#allocation10 + $0x300] sm:$0xff]
    %v1773 = vld [vmem:[#allocation10 + $0x308] sm:$0xff]
    %v1774 = vld [vmem:[#allocation10 + $0x310] sm:$0xff]
    %v1775 = vld [vmem:[#allocation10 + $0x318] sm:$0xff]
    %v1776 = vld [vmem:[#allocation10 + $0x320] sm:$0xff]
    %v1777 = vld [vmem:[#allocation10 + $0x328] sm:$0xff]
    %v1778 = vld [vmem:[#allocation10 + $0x330] sm:$0xff]
    %v1779 = vld [vmem:[#allocation10 + $0x338] sm:$0xff]
    %v1780 = vld [vmem:[#allocation10 + $0x340] sm:$0xff]
    %v1781 = vld [vmem:[#allocation10 + $0x348] sm:$0xff]
    %v1782 = vld [vmem:[#allocation10 + $0x350] sm:$0xff]
    %v1783 = vld [vmem:[#allocation10 + $0x358] sm:$0xff]
    %v1784 = vld [vmem:[#allocation10 + $0x360] sm:$0xff]
    %v1785 = vld [vmem:[#allocation10 + $0x368] sm:$0xff]
    %v1786 = vld [vmem:[#allocation10 + $0x370] sm:$0xff]
    %v1787 = vld [vmem:[#allocation10 + $0x378] sm:$0xff]
    %v1788 = vld [vmem:[#allocation10 + $0x380] sm:$0xff]
    %v1789 = vld [vmem:[#allocation10 + $0x388] sm:$0xff]
    %v1790 = vld [vmem:[#allocation10 + $0x390] sm:$0xff]
    %v1791 = vld [vmem:[#allocation10 + $0x398] sm:$0xff]
    %v1792 = vld [vmem:[#allocation10 + $0x3a0] sm:$0xff]
    %v1793 = vld [vmem:[#allocation10 + $0x3a8] sm:$0xff]
    %v1794 = vld [vmem:[#allocation10 + $0x3b0] sm:$0xff]
    %v1795 = vld [vmem:[#allocation10 + $0x3b8] sm:$0xff]
    %v1796 = vld [vmem:[#allocation10 + $0x3c0] sm:$0xff]
    %v1797 = vld [vmem:[#allocation10 + $0x3c8] sm:$0xff]
    %v1798 = vld [vmem:[#allocation10 + $0x3d0] sm:$0xff]
    %v1799 = vld [vmem:[#allocation10 + $0x3d8] sm:$0xff]
    %v1800 = vld [vmem:[#allocation10 + $0x3e0] sm:$0xff]
    %v1801 = vld [vmem:[#allocation10 + $0x3e8] sm:$0xff]
    %v1802 = vld [vmem:[#allocation10 + $0x3f0] sm:$0xff]
    %v1803 = vld [vmem:[#allocation10 + $0x3f8] sm:$0xff]
    %v1804 = vlaneseq
    %v1805 = vshrl.u32 %v1804, 7
    %v1806 = vsub.s32 0, %v1805
    %v1807 = vrot.slane %v1645, %v1806
    %1809 = vbcast.lane.b32.xlu0 %v1807, 256
    %v1810 = vpop.permute.xlu0 %1809
    %v1811 = vlaneseq
    %v1812 = vshrl.u32 %v1811, 7
    %v1813 = vsub.s32 1, %v1812
    %v1814 = vrot.slane %v1645, %v1813
    %1816 = vbcast.lane.b32.xlu0 %v1814, 256
    %v1817 = vpop.permute.xlu0 %1816
    %v1818 = vlaneseq
    %v1819 = vshrl.u32 %v1818, 7
    %v1820 = vsub.s32 2, %v1819
    %v1821 = vrot.slane %v1645, %v1820
    %1823 = vbcast.lane.b32.xlu0 %v1821, 256
    %v1824 = vpop.permute.xlu0 %1823
    %v1825 = vlaneseq
    %v1826 = vshrl.u32 %v1825, 7
    %v1827 = vsub.s32 3, %v1826
    %v1828 = vrot.slane %v1645, %v1827
    %1830 = vbcast.lane.b32.xlu0 %v1828, 256
    %v1831 = vpop.permute.xlu0 %1830
    %v1832 = vlaneseq
    %v1833 = vshrl.u32 %v1832, 7
    %v1834 = vsub.s32 4, %v1833
    %v1835 = vrot.slane %v1645, %v1834
    %1837 = vbcast.lane.b32.xlu0 %v1835, 256
    %v1838 = vpop.permute.xlu0 %1837
    %v1839 = vlaneseq
    %v1840 = vshrl.u32 %v1839, 7
    %v1841 = vsub.s32 5, %v1840
    %v1842 = vrot.slane %v1645, %v1841
    %1844 = vbcast.lane.b32.xlu0 %v1842, 256
    %v1845 = vpop.permute.xlu0 %1844
    %v1846 = vlaneseq
    %v1847 = vshrl.u32 %v1846, 7
    %v1848 = vsub.s32 6, %v1847
    %v1849 = vrot.slane %v1645, %v1848
    %1851 = vbcast.lane.b32.xlu0 %v1849, 256
    %v1852 = vpop.permute.xlu0 %1851
    %v1853 = vlaneseq
    %v1854 = vshrl.u32 %v1853, 7
    %v1855 = vsub.s32 7, %v1854
    %v1856 = vrot.slane %v1645, %v1855
    %1858 = vbcast.lane.b32.xlu0 %v1856, 256
    %v1859 = vpop.permute.xlu0 %1858
    %v1860 = vlaneseq
    %v1861 = vshrl.u32 %v1860, 7
    %v1862 = vsub.s32 0, %v1861
    %v1863 = vrot.slane %v1647, %v1862
    %1865 = vbcast.lane.b32.xlu0 %v1863, 256
    %v1866 = vpop.permute.xlu0 %1865
    %v1867 = vlaneseq
    %v1868 = vshrl.u32 %v1867, 7
    %v1869 = vsub.s32 1, %v1868
    %v1870 = vrot.slane %v1647, %v1869
    %1872 = vbcast.lane.b32.xlu0 %v1870, 256
    %v1873 = vpop.permute.xlu0 %1872
    %v1874 = vlaneseq
    %v1875 = vshrl.u32 %v1874, 7
    %v1876 = vsub.s32 2, %v1875
    %v1877 = vrot.slane %v1647, %v1876
    %1879 = vbcast.lane.b32.xlu0 %v1877, 256
    %v1880 = vpop.permute.xlu0 %1879
    %v1881 = vlaneseq
    %v1882 = vshrl.u32 %v1881, 7
    %v1883 = vsub.s32 3, %v1882
    %v1884 = vrot.slane %v1647, %v1883
    %1886 = vbcast.lane.b32.xlu0 %v1884, 256
    %v1887 = vpop.permute.xlu0 %1886
    %v1888 = vlaneseq
    %v1889 = vshrl.u32 %v1888, 7
    %v1890 = vsub.s32 4, %v1889
    %v1891 = vrot.slane %v1647, %v1890
    %1893 = vbcast.lane.b32.xlu0 %v1891, 256
    %v1894 = vpop.permute.xlu0 %1893
    %v1895 = vlaneseq
    %v1896 = vshrl.u32 %v1895, 7
    %v1897 = vsub.s32 5, %v1896
    %v1898 = vrot.slane %v1647, %v1897
    %1900 = vbcast.lane.b32.xlu0 %v1898, 256
    %v1901 = vpop.permute.xlu0 %1900
    %v1902 = vlaneseq
    %v1903 = vshrl.u32 %v1902, 7
    %v1904 = vsub.s32 6, %v1903
    %v1905 = vrot.slane %v1647, %v1904
    %1907 = vbcast.lane.b32.xlu0 %v1905, 256
    %v1908 = vpop.permute.xlu0 %1907
    %v1909 = vlaneseq
    %v1910 = vshrl.u32 %v1909, 7
    %v1911 = vsub.s32 7, %v1910
    %v1912 = vrot.slane %v1647, %v1911
    %1914 = vbcast.lane.b32.xlu0 %v1912, 256
    %v1915 = vpop.permute.xlu0 %1914
    %v1916 = vlaneseq
    %v1917 = vshrl.u32 %v1916, 7
    %v1918 = vsub.s32 0, %v1917
    %v1919 = vrot.slane %v1649, %v1918
    %1921 = vbcast.lane.b32.xlu0 %v1919, 256
    %v1922 = vpop.permute.xlu0 %1921
    %v1923 = vlaneseq
    %v1924 = vshrl.u32 %v1923, 7
    %v1925 = vsub.s32 1, %v1924
    %v1926 = vrot.slane %v1649, %v1925
    %1928 = vbcast.lane.b32.xlu0 %v1926, 256
    %v1929 = vpop.permute.xlu0 %1928
    %v1930 = vlaneseq
    %v1931 = vshrl.u32 %v1930, 7
    %v1932 = vsub.s32 2, %v1931
    %v1933 = vrot.slane %v1649, %v1932
    %1935 = vbcast.lane.b32.xlu0 %v1933, 256
    %v1936 = vpop.permute.xlu0 %1935
    %v1937 = vlaneseq
    %v1938 = vshrl.u32 %v1937, 7
    %v1939 = vsub.s32 3, %v1938
    %v1940 = vrot.slane %v1649, %v1939
    %1942 = vbcast.lane.b32.xlu0 %v1940, 256
    %v1943 = vpop.permute.xlu0 %1942
    %v1944 = vlaneseq
    %v1945 = vshrl.u32 %v1944, 7
    %v1946 = vsub.s32 4, %v1945
    %v1947 = vrot.slane %v1649, %v1946
    %1949 = vbcast.lane.b32.xlu0 %v1947, 256
    %v1950 = vpop.permute.xlu0 %1949
    %v1951 = vlaneseq
    %v1952 = vshrl.u32 %v1951, 7
    %v1953 = vsub.s32 5, %v1952
    %v1954 = vrot.slane %v1649, %v1953
    %1956 = vbcast.lane.b32.xlu0 %v1954, 256
    %v1957 = vpop.permute.xlu0 %1956
    %v1958 = vlaneseq
    %v1959 = vshrl.u32 %v1958, 7
    %v1960 = vsub.s32 6, %v1959
    %v1961 = vrot.slane %v1649, %v1960
    %1963 = vbcast.lane.b32.xlu0 %v1961, 256
    %v1964 = vpop.permute.xlu0 %1963
    %v1965 = vlaneseq
    %v1966 = vshrl.u32 %v1965, 7
    %v1967 = vsub.s32 7, %v1966
    %v1968 = vrot.slane %v1649, %v1967
    %1970 = vbcast.lane.b32.xlu0 %v1968, 256
    %v1971 = vpop.permute.xlu0 %1970
    %v1972 = vlaneseq
    %v1973 = vshrl.u32 %v1972, 7
    %v1974 = vsub.s32 0, %v1973
    %v1975 = vrot.slane %v1651, %v1974
    %1977 = vbcast.lane.b32.xlu0 %v1975, 256
    %v1978 = vpop.permute.xlu0 %1977
    %v1979 = vlaneseq
    %v1980 = vshrl.u32 %v1979, 7
    %v1981 = vsub.s32 1, %v1980
    %v1982 = vrot.slane %v1651, %v1981
    %1984 = vbcast.lane.b32.xlu0 %v1982, 256
    %v1985 = vpop.permute.xlu0 %1984
    %v1986 = vlaneseq
    %v1987 = vshrl.u32 %v1986, 7
    %v1988 = vsub.s32 2, %v1987
    %v1989 = vrot.slane %v1651, %v1988
    %1991 = vbcast.lane.b32.xlu0 %v1989, 256
    %v1992 = vpop.permute.xlu0 %1991
    %v1993 = vlaneseq
    %v1994 = vshrl.u32 %v1993, 7
    %v1995 = vsub.s32 3, %v1994
    %v1996 = vrot.slane %v1651, %v1995
    %1998 = vbcast.lane.b32.xlu0 %v1996, 256
    %v1999 = vpop.permute.xlu0 %1998
    %v2000 = vlaneseq
    %v2001 = vshrl.u32 %v2000, 7
    %v2002 = vsub.s32 4, %v2001
    %v2003 = vrot.slane %v1651, %v2002
    %2005 = vbcast.lane.b32.xlu0 %v2003, 256
    %v2006 = vpop.permute.xlu0 %2005
    %v2007 = vlaneseq
    %v2008 = vshrl.u32 %v2007, 7
    %v2009 = vsub.s32 5, %v2008
    %v2010 = vrot.slane %v1651, %v2009
    %2012 = vbcast.lane.b32.xlu0 %v2010, 256
    %v2013 = vpop.permute.xlu0 %2012
    %v2014 = vlaneseq
    %v2015 = vshrl.u32 %v2014, 7
    %v2016 = vsub.s32 6, %v2015
    %v2017 = vrot.slane %v1651, %v2016
    %2019 = vbcast.lane.b32.xlu0 %v2017, 256
    %v2020 = vpop.permute.xlu0 %2019
    %v2021 = vlaneseq
    %v2022 = vshrl.u32 %v2021, 7
    %v2023 = vsub.s32 7, %v2022
    %v2024 = vrot.slane %v1651, %v2023
    %2026 = vbcast.lane.b32.xlu0 %v2024, 256
    %v2027 = vpop.permute.xlu0 %2026
    %v2028 = vlaneseq
    %v2029 = vshrl.u32 %v2028, 7
    %v2030 = vsub.s32 0, %v2029
    %v2031 = vrot.slane %v1653, %v2030
    %2033 = vbcast.lane.b32.xlu0 %v2031, 256
    %v2034 = vpop.permute.xlu0 %2033
    %v2035 = vlaneseq
    %v2036 = vshrl.u32 %v2035, 7
    %v2037 = vsub.s32 1, %v2036
    %v2038 = vrot.slane %v1653, %v2037
    %2040 = vbcast.lane.b32.xlu0 %v2038, 256
    %v2041 = vpop.permute.xlu0 %2040
    %v2042 = vlaneseq
    %v2043 = vshrl.u32 %v2042, 7
    %v2044 = vsub.s32 2, %v2043
    %v2045 = vrot.slane %v1653, %v2044
    %2047 = vbcast.lane.b32.xlu0 %v2045, 256
    %v2048 = vpop.permute.xlu0 %2047
    %v2049 = vlaneseq
    %v2050 = vshrl.u32 %v2049, 7
    %v2051 = vsub.s32 3, %v2050
    %v2052 = vrot.slane %v1653, %v2051
    %2054 = vbcast.lane.b32.xlu0 %v2052, 256
    %v2055 = vpop.permute.xlu0 %2054
    %v2056 = vlaneseq
    %v2057 = vshrl.u32 %v2056, 7
    %v2058 = vsub.s32 4, %v2057
    %v2059 = vrot.slane %v1653, %v2058
    %2061 = vbcast.lane.b32.xlu0 %v2059, 256
    %v2062 = vpop.permute.xlu0 %2061
    %v2063 = vlaneseq
    %v2064 = vshrl.u32 %v2063, 7
    %v2065 = vsub.s32 5, %v2064
    %v2066 = vrot.slane %v1653, %v2065
    %2068 = vbcast.lane.b32.xlu0 %v2066, 256
    %v2069 = vpop.permute.xlu0 %2068
    %v2070 = vlaneseq
    %v2071 = vshrl.u32 %v2070, 7
    %v2072 = vsub.s32 6, %v2071
    %v2073 = vrot.slane %v1653, %v2072
    %2075 = vbcast.lane.b32.xlu0 %v2073, 256
    %v2076 = vpop.permute.xlu0 %2075
    %v2077 = vlaneseq
    %v2078 = vshrl.u32 %v2077, 7
    %v2079 = vsub.s32 7, %v2078
    %v2080 = vrot.slane %v1653, %v2079
    %2082 = vbcast.lane.b32.xlu0 %v2080, 256
    %v2083 = vpop.permute.xlu0 %2082
    %v2084 = vlaneseq
    %v2085 = vshrl.u32 %v2084, 7
    %v2086 = vsub.s32 0, %v2085
    %v2087 = vrot.slane %v1655, %v2086
    %2089 = vbcast.lane.b32.xlu0 %v2087, 256
    %v2090 = vpop.permute.xlu0 %2089
    %v2091 = vlaneseq
    %v2092 = vshrl.u32 %v2091, 7
    %v2093 = vsub.s32 1, %v2092
    %v2094 = vrot.slane %v1655, %v2093
    %2096 = vbcast.lane.b32.xlu0 %v2094, 256
    %v2097 = vpop.permute.xlu0 %2096
    %v2098 = vlaneseq
    %v2099 = vshrl.u32 %v2098, 7
    %v2100 = vsub.s32 2, %v2099
    %v2101 = vrot.slane %v1655, %v2100
    %2103 = vbcast.lane.b32.xlu0 %v2101, 256
    %v2104 = vpop.permute.xlu0 %2103
    %v2105 = vlaneseq
    %v2106 = vshrl.u32 %v2105, 7
    %v2107 = vsub.s32 3, %v2106
    %v2108 = vrot.slane %v1655, %v2107
    %2110 = vbcast.lane.b32.xlu0 %v2108, 256
    %v2111 = vpop.permute.xlu0 %2110
    %v2112 = vlaneseq
    %v2113 = vshrl.u32 %v2112, 7
    %v2114 = vsub.s32 4, %v2113
    %v2115 = vrot.slane %v1655, %v2114
    %2117 = vbcast.lane.b32.xlu0 %v2115, 256
    %v2118 = vpop.permute.xlu0 %2117
    %v2119 = vlaneseq
    %v2120 = vshrl.u32 %v2119, 7
    %v2121 = vsub.s32 5, %v2120
    %v2122 = vrot.slane %v1655, %v2121
    %2124 = vbcast.lane.b32.xlu0 %v2122, 256
    %v2125 = vpop.permute.xlu0 %2124
    %v2126 = vlaneseq
    %v2127 = vshrl.u32 %v2126, 7
    %v2128 = vsub.s32 6, %v2127
    %v2129 = vrot.slane %v1655, %v2128
    %2131 = vbcast.lane.b32.xlu0 %v2129, 256
    %v2132 = vpop.permute.xlu0 %2131
    %v2133 = vlaneseq
    %v2134 = vshrl.u32 %v2133, 7
    %v2135 = vsub.s32 7, %v2134
    %v2136 = vrot.slane %v1655, %v2135
    %2138 = vbcast.lane.b32.xlu0 %v2136, 256
    %v2139 = vpop.permute.xlu0 %2138
    %v2140 = vlaneseq
    %v2141 = vshrl.u32 %v2140, 7
    %v2142 = vsub.s32 0, %v2141
    %v2143 = vrot.slane %v1657, %v2142
    %2145 = vbcast.lane.b32.xlu0 %v2143, 256
    %v2146 = vpop.permute.xlu0 %2145
    %v2147 = vlaneseq
    %v2148 = vshrl.u32 %v2147, 7
    %v2149 = vsub.s32 1, %v2148
    %v2150 = vrot.slane %v1657, %v2149
    %2152 = vbcast.lane.b32.xlu0 %v2150, 256
    %v2153 = vpop.permute.xlu0 %2152
    %v2154 = vlaneseq
    %v2155 = vshrl.u32 %v2154, 7
    %v2156 = vsub.s32 2, %v2155
    %v2157 = vrot.slane %v1657, %v2156
    %2159 = vbcast.lane.b32.xlu0 %v2157, 256
    %v2160 = vpop.permute.xlu0 %2159
    %v2161 = vlaneseq
    %v2162 = vshrl.u32 %v2161, 7
    %v2163 = vsub.s32 3, %v2162
    %v2164 = vrot.slane %v1657, %v2163
    %2166 = vbcast.lane.b32.xlu0 %v2164, 256
    %v2167 = vpop.permute.xlu0 %2166
    %v2168 = vlaneseq
    %v2169 = vshrl.u32 %v2168, 7
    %v2170 = vsub.s32 4, %v2169
    %v2171 = vrot.slane %v1657, %v2170
    %2173 = vbcast.lane.b32.xlu0 %v2171, 256
    %v2174 = vpop.permute.xlu0 %2173
    %v2175 = vlaneseq
    %v2176 = vshrl.u32 %v2175, 7
    %v2177 = vsub.s32 5, %v2176
    %v2178 = vrot.slane %v1657, %v2177
    %2180 = vbcast.lane.b32.xlu0 %v2178, 256
    %v2181 = vpop.permute.xlu0 %2180
    %v2182 = vlaneseq
    %v2183 = vshrl.u32 %v2182, 7
    %v2184 = vsub.s32 6, %v2183
    %v2185 = vrot.slane %v1657, %v2184
    %2187 = vbcast.lane.b32.xlu0 %v2185, 256
    %v2188 = vpop.permute.xlu0 %2187
    %v2189 = vlaneseq
    %v2190 = vshrl.u32 %v2189, 7
    %v2191 = vsub.s32 7, %v2190
    %v2192 = vrot.slane %v1657, %v2191
    %2194 = vbcast.lane.b32.xlu0 %v2192, 256
    %v2195 = vpop.permute.xlu0 %2194
    %v2196 = vlaneseq
    %v2197 = vshrl.u32 %v2196, 7
    %v2198 = vsub.s32 0, %v2197
    %v2199 = vrot.slane %v1659, %v2198
    %2201 = vbcast.lane.b32.xlu0 %v2199, 256
    %v2202 = vpop.permute.xlu0 %2201
    %v2203 = vlaneseq
    %v2204 = vshrl.u32 %v2203, 7
    %v2205 = vsub.s32 1, %v2204
    %v2206 = vrot.slane %v1659, %v2205
    %2208 = vbcast.lane.b32.xlu0 %v2206, 256
    %v2209 = vpop.permute.xlu0 %2208
    %v2210 = vlaneseq
    %v2211 = vshrl.u32 %v2210, 7
    %v2212 = vsub.s32 2, %v2211
    %v2213 = vrot.slane %v1659, %v2212
    %2215 = vbcast.lane.b32.xlu0 %v2213, 256
    %v2216 = vpop.permute.xlu0 %2215
    %v2217 = vlaneseq
    %v2218 = vshrl.u32 %v2217, 7
    %v2219 = vsub.s32 3, %v2218
    %v2220 = vrot.slane %v1659, %v2219
    %2222 = vbcast.lane.b32.xlu0 %v2220, 256
    %v2223 = vpop.permute.xlu0 %2222
    %v2224 = vlaneseq
    %v2225 = vshrl.u32 %v2224, 7
    %v2226 = vsub.s32 4, %v2225
    %v2227 = vrot.slane %v1659, %v2226
    %2229 = vbcast.lane.b32.xlu0 %v2227, 256
    %v2230 = vpop.permute.xlu0 %2229
    %v2231 = vlaneseq
    %v2232 = vshrl.u32 %v2231, 7
    %v2233 = vsub.s32 5, %v2232
    %v2234 = vrot.slane %v1659, %v2233
    %2236 = vbcast.lane.b32.xlu0 %v2234, 256
    %v2237 = vpop.permute.xlu0 %2236
    %v2238 = vlaneseq
    %v2239 = vshrl.u32 %v2238, 7
    %v2240 = vsub.s32 6, %v2239
    %v2241 = vrot.slane %v1659, %v2240
    %2243 = vbcast.lane.b32.xlu0 %v2241, 256
    %v2244 = vpop.permute.xlu0 %2243
    %v2245 = vlaneseq
    %v2246 = vshrl.u32 %v2245, 7
    %v2247 = vsub.s32 7, %v2246
    %v2248 = vrot.slane %v1659, %v2247
    %2250 = vbcast.lane.b32.xlu0 %v2248, 256
    %v2251 = vpop.permute.xlu0 %2250
    %v2252 = vlaneseq
    %v2253 = vshrl.u32 %v2252, 7
    %v2254 = vsub.s32 0, %v2253
    %v2255 = vrot.slane %v1661, %v2254
    %2257 = vbcast.lane.b32.xlu0 %v2255, 256
    %v2258 = vpop.permute.xlu0 %2257
    %v2259 = vlaneseq
    %v2260 = vshrl.u32 %v2259, 7
    %v2261 = vsub.s32 1, %v2260
    %v2262 = vrot.slane %v1661, %v2261
    %2264 = vbcast.lane.b32.xlu0 %v2262, 256
    %v2265 = vpop.permute.xlu0 %2264
    %v2266 = vlaneseq
    %v2267 = vshrl.u32 %v2266, 7
    %v2268 = vsub.s32 2, %v2267
    %v2269 = vrot.slane %v1661, %v2268
    %2271 = vbcast.lane.b32.xlu0 %v2269, 256
    %v2272 = vpop.permute.xlu0 %2271
    %v2273 = vlaneseq
    %v2274 = vshrl.u32 %v2273, 7
    %v2275 = vsub.s32 3, %v2274
    %v2276 = vrot.slane %v1661, %v2275
    %2278 = vbcast.lane.b32.xlu0 %v2276, 256
    %v2279 = vpop.permute.xlu0 %2278
    %v2280 = vlaneseq
    %v2281 = vshrl.u32 %v2280, 7
    %v2282 = vsub.s32 4, %v2281
    %v2283 = vrot.slane %v1661, %v2282
    %2285 = vbcast.lane.b32.xlu0 %v2283, 256
    %v2286 = vpop.permute.xlu0 %2285
    %v2287 = vlaneseq
    %v2288 = vshrl.u32 %v2287, 7
    %v2289 = vsub.s32 5, %v2288
    %v2290 = vrot.slane %v1661, %v2289
    %2292 = vbcast.lane.b32.xlu0 %v2290, 256
    %v2293 = vpop.permute.xlu0 %2292
    %v2294 = vlaneseq
    %v2295 = vshrl.u32 %v2294, 7
    %v2296 = vsub.s32 6, %v2295
    %v2297 = vrot.slane %v1661, %v2296
    %2299 = vbcast.lane.b32.xlu0 %v2297, 256
    %v2300 = vpop.permute.xlu0 %2299
    %v2301 = vlaneseq
    %v2302 = vshrl.u32 %v2301, 7
    %v2303 = vsub.s32 7, %v2302
    %v2304 = vrot.slane %v1661, %v2303
    %2306 = vbcast.lane.b32.xlu0 %v2304, 256
    %v2307 = vpop.permute.xlu0 %2306
    %v2308 = vlaneseq
    %v2309 = vshrl.u32 %v2308, 7
    %v2310 = vsub.s32 0, %v2309
    %v2311 = vrot.slane %v1663, %v2310
    %2313 = vbcast.lane.b32.xlu0 %v2311, 256
    %v2314 = vpop.permute.xlu0 %2313
    %v2315 = vlaneseq
    %v2316 = vshrl.u32 %v2315, 7
    %v2317 = vsub.s32 1, %v2316
    %v2318 = vrot.slane %v1663, %v2317
    %2320 = vbcast.lane.b32.xlu0 %v2318, 256
    %v2321 = vpop.permute.xlu0 %2320
    %v2322 = vlaneseq
    %v2323 = vshrl.u32 %v2322, 7
    %v2324 = vsub.s32 2, %v2323
    %v2325 = vrot.slane %v1663, %v2324
    %2327 = vbcast.lane.b32.xlu0 %v2325, 256
    %v2328 = vpop.permute.xlu0 %2327
    %v2329 = vlaneseq
    %v2330 = vshrl.u32 %v2329, 7
    %v2331 = vsub.s32 3, %v2330
    %v2332 = vrot.slane %v1663, %v2331
    %2334 = vbcast.lane.b32.xlu0 %v2332, 256
    %v2335 = vpop.permute.xlu0 %2334
    %v2336 = vlaneseq
    %v2337 = vshrl.u32 %v2336, 7
    %v2338 = vsub.s32 4, %v2337
    %v2339 = vrot.slane %v1663, %v2338
    %2341 = vbcast.lane.b32.xlu0 %v2339, 256
    %v2342 = vpop.permute.xlu0 %2341
    %v2343 = vlaneseq
    %v2344 = vshrl.u32 %v2343, 7
    %v2345 = vsub.s32 5, %v2344
    %v2346 = vrot.slane %v1663, %v2345
    %2348 = vbcast.lane.b32.xlu0 %v2346, 256
    %v2349 = vpop.permute.xlu0 %2348
    %v2350 = vlaneseq
    %v2351 = vshrl.u32 %v2350, 7
    %v2352 = vsub.s32 6, %v2351
    %v2353 = vrot.slane %v1663, %v2352
    %2355 = vbcast.lane.b32.xlu0 %v2353, 256
    %v2356 = vpop.permute.xlu0 %2355
    %v2357 = vlaneseq
    %v2358 = vshrl.u32 %v2357, 7
    %v2359 = vsub.s32 7, %v2358
    %v2360 = vrot.slane %v1663, %v2359
    %2362 = vbcast.lane.b32.xlu0 %v2360, 256
    %v2363 = vpop.permute.xlu0 %2362
    %v2364 = vlaneseq
    %v2365 = vshrl.u32 %v2364, 7
    %v2366 = vsub.s32 0, %v2365
    %v2367 = vrot.slane %v1665, %v2366
    %2369 = vbcast.lane.b32.xlu0 %v2367, 256
    %v2370 = vpop.permute.xlu0 %2369
    %v2371 = vlaneseq
    %v2372 = vshrl.u32 %v2371, 7
    %v2373 = vsub.s32 1, %v2372
    %v2374 = vrot.slane %v1665, %v2373
    %2376 = vbcast.lane.b32.xlu0 %v2374, 256
    %v2377 = vpop.permute.xlu0 %2376
    %v2378 = vlaneseq
    %v2379 = vshrl.u32 %v2378, 7
    %v2380 = vsub.s32 2, %v2379
    %v2381 = vrot.slane %v1665, %v2380
    %2383 = vbcast.lane.b32.xlu0 %v2381, 256
    %v2384 = vpop.permute.xlu0 %2383
    %v2385 = vlaneseq
    %v2386 = vshrl.u32 %v2385, 7
    %v2387 = vsub.s32 3, %v2386
    %v2388 = vrot.slane %v1665, %v2387
    %2390 = vbcast.lane.b32.xlu0 %v2388, 256
    %v2391 = vpop.permute.xlu0 %2390
    %v2392 = vlaneseq
    %v2393 = vshrl.u32 %v2392, 7
    %v2394 = vsub.s32 4, %v2393
    %v2395 = vrot.slane %v1665, %v2394
    %2397 = vbcast.lane.b32.xlu0 %v2395, 256
    %v2398 = vpop.permute.xlu0 %2397
    %v2399 = vlaneseq
    %v2400 = vshrl.u32 %v2399, 7
    %v2401 = vsub.s32 5, %v2400
    %v2402 = vrot.slane %v1665, %v2401
    %2404 = vbcast.lane.b32.xlu0 %v2402, 256
    %v2405 = vpop.permute.xlu0 %2404
    %v2406 = vlaneseq
    %v2407 = vshrl.u32 %v2406, 7
    %v2408 = vsub.s32 6, %v2407
    %v2409 = vrot.slane %v1665, %v2408
    %2411 = vbcast.lane.b32.xlu0 %v2409, 256
    %v2412 = vpop.permute.xlu0 %2411
    %v2413 = vlaneseq
    %v2414 = vshrl.u32 %v2413, 7
    %v2415 = vsub.s32 7, %v2414
    %v2416 = vrot.slane %v1665, %v2415
    %2418 = vbcast.lane.b32.xlu0 %v2416, 256
    %v2419 = vpop.permute.xlu0 %2418
    %v2420 = vlaneseq
    %v2421 = vshrl.u32 %v2420, 7
    %v2422 = vsub.s32 0, %v2421
    %v2423 = vrot.slane %v1667, %v2422
    %2425 = vbcast.lane.b32.xlu0 %v2423, 256
    %v2426 = vpop.permute.xlu0 %2425
    %v2427 = vlaneseq
    %v2428 = vshrl.u32 %v2427, 7
    %v2429 = vsub.s32 1, %v2428
    %v2430 = vrot.slane %v1667, %v2429
    %2432 = vbcast.lane.b32.xlu0 %v2430, 256
    %v2433 = vpop.permute.xlu0 %2432
    %v2434 = vlaneseq
    %v2435 = vshrl.u32 %v2434, 7
    %v2436 = vsub.s32 2, %v2435
    %v2437 = vrot.slane %v1667, %v2436
    %2439 = vbcast.lane.b32.xlu0 %v2437, 256
    %v2440 = vpop.permute.xlu0 %2439
    %v2441 = vlaneseq
    %v2442 = vshrl.u32 %v2441, 7
    %v2443 = vsub.s32 3, %v2442
    %v2444 = vrot.slane %v1667, %v2443
    %2446 = vbcast.lane.b32.xlu0 %v2444, 256
    %v2447 = vpop.permute.xlu0 %2446
    %v2448 = vlaneseq
    %v2449 = vshrl.u32 %v2448, 7
    %v2450 = vsub.s32 4, %v2449
    %v2451 = vrot.slane %v1667, %v2450
    %2453 = vbcast.lane.b32.xlu0 %v2451, 256
    %v2454 = vpop.permute.xlu0 %2453
    %v2455 = vlaneseq
    %v2456 = vshrl.u32 %v2455, 7
    %v2457 = vsub.s32 5, %v2456
    %v2458 = vrot.slane %v1667, %v2457
    %2460 = vbcast.lane.b32.xlu0 %v2458, 256
    %v2461 = vpop.permute.xlu0 %2460
    %v2462 = vlaneseq
    %v2463 = vshrl.u32 %v2462, 7
    %v2464 = vsub.s32 6, %v2463
    %v2465 = vrot.slane %v1667, %v2464
    %2467 = vbcast.lane.b32.xlu0 %v2465, 256
    %v2468 = vpop.permute.xlu0 %2467
    %v2469 = vlaneseq
    %v2470 = vshrl.u32 %v2469, 7
    %v2471 = vsub.s32 7, %v2470
    %v2472 = vrot.slane %v1667, %v2471
    %2474 = vbcast.lane.b32.xlu0 %v2472, 256
    %v2475 = vpop.permute.xlu0 %2474
    %v2476 = vlaneseq
    %v2477 = vshrl.u32 %v2476, 7
    %v2478 = vsub.s32 0, %v2477
    %v2479 = vrot.slane %v1669, %v2478
    %2481 = vbcast.lane.b32.xlu0 %v2479, 256
    %v2482 = vpop.permute.xlu0 %2481
    %v2483 = vlaneseq
    %v2484 = vshrl.u32 %v2483, 7
    %v2485 = vsub.s32 1, %v2484
    %v2486 = vrot.slane %v1669, %v2485
    %2488 = vbcast.lane.b32.xlu0 %v2486, 256
    %v2489 = vpop.permute.xlu0 %2488
    %v2490 = vlaneseq
    %v2491 = vshrl.u32 %v2490, 7
    %v2492 = vsub.s32 2, %v2491
    %v2493 = vrot.slane %v1669, %v2492
    %2495 = vbcast.lane.b32.xlu0 %v2493, 256
    %v2496 = vpop.permute.xlu0 %2495
    %v2497 = vlaneseq
    %v2498 = vshrl.u32 %v2497, 7
    %v2499 = vsub.s32 3, %v2498
    %v2500 = vrot.slane %v1669, %v2499
    %2502 = vbcast.lane.b32.xlu0 %v2500, 256
    %v2503 = vpop.permute.xlu0 %2502
    %v2504 = vlaneseq
    %v2505 = vshrl.u32 %v2504, 7
    %v2506 = vsub.s32 4, %v2505
    %v2507 = vrot.slane %v1669, %v2506
    %2509 = vbcast.lane.b32.xlu0 %v2507, 256
    %v2510 = vpop.permute.xlu0 %2509
    %v2511 = vlaneseq
    %v2512 = vshrl.u32 %v2511, 7
    %v2513 = vsub.s32 5, %v2512
    %v2514 = vrot.slane %v1669, %v2513
    %2516 = vbcast.lane.b32.xlu0 %v2514, 256
    %v2517 = vpop.permute.xlu0 %2516
    %v2518 = vlaneseq
    %v2519 = vshrl.u32 %v2518, 7
    %v2520 = vsub.s32 6, %v2519
    %v2521 = vrot.slane %v1669, %v2520
    %2523 = vbcast.lane.b32.xlu0 %v2521, 256
    %v2524 = vpop.permute.xlu0 %2523
    %v2525 = vlaneseq
    %v2526 = vshrl.u32 %v2525, 7
    %v2527 = vsub.s32 7, %v2526
    %v2528 = vrot.slane %v1669, %v2527
    %2530 = vbcast.lane.b32.xlu0 %v2528, 256
    %v2531 = vpop.permute.xlu0 %2530
    %v2532 = vlaneseq
    %v2533 = vshrl.u32 %v2532, 7
    %v2534 = vsub.s32 0, %v2533
    %v2535 = vrot.slane %v1671, %v2534
    %2537 = vbcast.lane.b32.xlu0 %v2535, 256
    %v2538 = vpop.permute.xlu0 %2537
    %v2539 = vlaneseq
    %v2540 = vshrl.u32 %v2539, 7
    %v2541 = vsub.s32 1, %v2540
    %v2542 = vrot.slane %v1671, %v2541
    %2544 = vbcast.lane.b32.xlu0 %v2542, 256
    %v2545 = vpop.permute.xlu0 %2544
    %v2546 = vlaneseq
    %v2547 = vshrl.u32 %v2546, 7
    %v2548 = vsub.s32 2, %v2547
    %v2549 = vrot.slane %v1671, %v2548
    %2551 = vbcast.lane.b32.xlu0 %v2549, 256
    %v2552 = vpop.permute.xlu0 %2551
    %v2553 = vlaneseq
    %v2554 = vshrl.u32 %v2553, 7
    %v2555 = vsub.s32 3, %v2554
    %v2556 = vrot.slane %v1671, %v2555
    %2558 = vbcast.lane.b32.xlu0 %v2556, 256
    %v2559 = vpop.permute.xlu0 %2558
    %v2560 = vlaneseq
    %v2561 = vshrl.u32 %v2560, 7
    %v2562 = vsub.s32 4, %v2561
    %v2563 = vrot.slane %v1671, %v2562
    %2565 = vbcast.lane.b32.xlu0 %v2563, 256
    %v2566 = vpop.permute.xlu0 %2565
    %v2567 = vlaneseq
    %v2568 = vshrl.u32 %v2567, 7
    %v2569 = vsub.s32 5, %v2568
    %v2570 = vrot.slane %v1671, %v2569
    %2572 = vbcast.lane.b32.xlu0 %v2570, 256
    %v2573 = vpop.permute.xlu0 %2572
    %v2574 = vlaneseq
    %v2575 = vshrl.u32 %v2574, 7
    %v2576 = vsub.s32 6, %v2575
    %v2577 = vrot.slane %v1671, %v2576
    %2579 = vbcast.lane.b32.xlu0 %v2577, 256
    %v2580 = vpop.permute.xlu0 %2579
    %v2581 = vlaneseq
    %v2582 = vshrl.u32 %v2581, 7
    %v2583 = vsub.s32 7, %v2582
    %v2584 = vrot.slane %v1671, %v2583
    %2586 = vbcast.lane.b32.xlu0 %v2584, 256
    %v2587 = vpop.permute.xlu0 %2586
    %v2588 = vlaneseq
    %v2589 = vshrl.u32 %v2588, 7
    %v2590 = vsub.s32 0, %v2589
    %v2591 = vrot.slane %v1673, %v2590
    %2593 = vbcast.lane.b32.xlu0 %v2591, 256
    %v2594 = vpop.permute.xlu0 %2593
    %v2595 = vlaneseq
    %v2596 = vshrl.u32 %v2595, 7
    %v2597 = vsub.s32 1, %v2596
    %v2598 = vrot.slane %v1673, %v2597
    %2600 = vbcast.lane.b32.xlu0 %v2598, 256
    %v2601 = vpop.permute.xlu0 %2600
    %v2602 = vlaneseq
    %v2603 = vshrl.u32 %v2602, 7
    %v2604 = vsub.s32 2, %v2603
    %v2605 = vrot.slane %v1673, %v2604
    %2607 = vbcast.lane.b32.xlu0 %v2605, 256
    %v2608 = vpop.permute.xlu0 %2607
    %v2609 = vlaneseq
    %v2610 = vshrl.u32 %v2609, 7
    %v2611 = vsub.s32 3, %v2610
    %v2612 = vrot.slane %v1673, %v2611
    %2614 = vbcast.lane.b32.xlu0 %v2612, 256
    %v2615 = vpop.permute.xlu0 %2614
    %v2616 = vlaneseq
    %v2617 = vshrl.u32 %v2616, 7
    %v2618 = vsub.s32 4, %v2617
    %v2619 = vrot.slane %v1673, %v2618
    %2621 = vbcast.lane.b32.xlu0 %v2619, 256
    %v2622 = vpop.permute.xlu0 %2621
    %v2623 = vlaneseq
    %v2624 = vshrl.u32 %v2623, 7
    %v2625 = vsub.s32 5, %v2624
    %v2626 = vrot.slane %v1673, %v2625
    %2628 = vbcast.lane.b32.xlu0 %v2626, 256
    %v2629 = vpop.permute.xlu0 %2628
    %v2630 = vlaneseq
    %v2631 = vshrl.u32 %v2630, 7
    %v2632 = vsub.s32 6, %v2631
    %v2633 = vrot.slane %v1673, %v2632
    %2635 = vbcast.lane.b32.xlu0 %v2633, 256
    %v2636 = vpop.permute.xlu0 %2635
    %v2637 = vlaneseq
    %v2638 = vshrl.u32 %v2637, 7
    %v2639 = vsub.s32 7, %v2638
    %v2640 = vrot.slane %v1673, %v2639
    %2642 = vbcast.lane.b32.xlu0 %v2640, 256
    %v2643 = vpop.permute.xlu0 %2642
    %v2644 = vlaneseq
    %v2645 = vshrl.u32 %v2644, 7
    %v2646 = vsub.s32 0, %v2645
    %v2647 = vrot.slane %v1675, %v2646
    %2649 = vbcast.lane.b32.xlu0 %v2647, 256
    %v2650 = vpop.permute.xlu0 %2649
    %v2651 = vlaneseq
    %v2652 = vshrl.u32 %v2651, 7
    %v2653 = vsub.s32 1, %v2652
    %v2654 = vrot.slane %v1675, %v2653
    %2656 = vbcast.lane.b32.xlu0 %v2654, 256
    %v2657 = vpop.permute.xlu0 %2656
    %v2658 = vlaneseq
    %v2659 = vshrl.u32 %v2658, 7
    %v2660 = vsub.s32 2, %v2659
    %v2661 = vrot.slane %v1675, %v2660
    %2663 = vbcast.lane.b32.xlu0 %v2661, 256
    %v2664 = vpop.permute.xlu0 %2663
    %v2665 = vlaneseq
    %v2666 = vshrl.u32 %v2665, 7
    %v2667 = vsub.s32 3, %v2666
    %v2668 = vrot.slane %v1675, %v2667
    %2670 = vbcast.lane.b32.xlu0 %v2668, 256
    %v2671 = vpop.permute.xlu0 %2670
    %v2672 = vlaneseq
    %v2673 = vshrl.u32 %v2672, 7
    %v2674 = vsub.s32 4, %v2673
    %v2675 = vrot.slane %v1675, %v2674
    %2677 = vbcast.lane.b32.xlu0 %v2675, 256
    %v2678 = vpop.permute.xlu0 %2677
    %v2679 = vlaneseq
    %v2680 = vshrl.u32 %v2679, 7
    %v2681 = vsub.s32 5, %v2680
    %v2682 = vrot.slane %v1675, %v2681
    %2684 = vbcast.lane.b32.xlu0 %v2682, 256
    %v2685 = vpop.permute.xlu0 %2684
    %v2686 = vlaneseq
    %v2687 = vshrl.u32 %v2686, 7
    %v2688 = vsub.s32 6, %v2687
    %v2689 = vrot.slane %v1675, %v2688
    %2691 = vbcast.lane.b32.xlu0 %v2689, 256
    %v2692 = vpop.permute.xlu0 %2691
    %v2693 = vlaneseq
    %v2694 = vshrl.u32 %v2693, 7
    %v2695 = vsub.s32 7, %v2694
    %v2696 = vrot.slane %v1675, %v2695
    %2698 = vbcast.lane.b32.xlu0 %v2696, 256
    %v2699 = vpop.permute.xlu0 %2698
    %v2700 = vmul.f32 %v1810, %v1676
    %v2701 = vmul.f32 %v1817, %v1677
    %v2702 = vmul.f32 %v1824, %v1678
    %v2703 = vmul.f32 %v1831, %v1679
    %v2704 = vmul.f32 %v1838, %v1680
    %v2705 = vmul.f32 %v1845, %v1681
    %v2706 = vmul.f32 %v1852, %v1682
    %v2707 = vmul.f32 %v1859, %v1683
    %v2708 = vmul.f32 %v1866, %v1684
    %v2709 = vmul.f32 %v1873, %v1685
    %v2710 = vmul.f32 %v1880, %v1686
    %v2711 = vmul.f32 %v1887, %v1687
    %v2712 = vmul.f32 %v1894, %v1688
    %v2713 = vmul.f32 %v1901, %v1689
    %v2714 = vmul.f32 %v1908, %v1690
    %v2715 = vmul.f32 %v1915, %v1691
    %v2716 = vmul.f32 %v1922, %v1692
    %v2717 = vmul.f32 %v1929, %v1693
    %v2718 = vmul.f32 %v1936, %v1694
    %v2719 = vmul.f32 %v1943, %v1695
    %v2720 = vmul.f32 %v1950, %v1696
    %v2721 = vmul.f32 %v1957, %v1697
    %v2722 = vmul.f32 %v1964, %v1698
    %v2723 = vmul.f32 %v1971, %v1699
    %v2724 = vmul.f32 %v1978, %v1700
    %v2725 = vmul.f32 %v1985, %v1701
    %v2726 = vmul.f32 %v1992, %v1702
    %v2727 = vmul.f32 %v1999, %v1703
    %v2728 = vmul.f32 %v2006, %v1704
    %v2729 = vmul.f32 %v2013, %v1705
    %v2730 = vmul.f32 %v2020, %v1706
    %v2731 = vmul.f32 %v2027, %v1707
    %v2732 = vmul.f32 %v2034, %v1708
    %v2733 = vmul.f32 %v2041, %v1709
    %v2734 = vmul.f32 %v2048, %v1710
    %v2735 = vmul.f32 %v2055, %v1711
    %v2736 = vmul.f32 %v2062, %v1712
    %v2737 = vmul.f32 %v2069, %v1713
    %v2738 = vmul.f32 %v2076, %v1714
    %v2739 = vmul.f32 %v2083, %v1715
    %v2740 = vmul.f32 %v2090, %v1716
    %v2741 = vmul.f32 %v2097, %v1717
    %v2742 = vmul.f32 %v2104, %v1718
    %v2743 = vmul.f32 %v2111, %v1719
    %v2744 = vmul.f32 %v2118, %v1720
    %v2745 = vmul.f32 %v2125, %v1721
    %v2746 = vmul.f32 %v2132, %v1722
    %v2747 = vmul.f32 %v2139, %v1723
    %v2748 = vmul.f32 %v2146, %v1724
    %v2749 = vmul.f32 %v2153, %v1725
    %v2750 = vmul.f32 %v2160, %v1726
    %v2751 = vmul.f32 %v2167, %v1727
    %v2752 = vmul.f32 %v2174, %v1728
    %v2753 = vmul.f32 %v2181, %v1729
    %v2754 = vmul.f32 %v2188, %v1730
    %v2755 = vmul.f32 %v2195, %v1731
    %v2756 = vmul.f32 %v2202, %v1732
    %v2757 = vmul.f32 %v2209, %v1733
    %v2758 = vmul.f32 %v2216, %v1734
    %v2759 = vmul.f32 %v2223, %v1735
    %v2760 = vmul.f32 %v2230, %v1736
    %v2761 = vmul.f32 %v2237, %v1737
    %v2762 = vmul.f32 %v2244, %v1738
    %v2763 = vmul.f32 %v2251, %v1739
    %v2764 = vmul.f32 %v2258, %v1740
    %v2765 = vmul.f32 %v2265, %v1741
    %v2766 = vmul.f32 %v2272, %v1742
    %v2767 = vmul.f32 %v2279, %v1743
    %v2768 = vmul.f32 %v2286, %v1744
    %v2769 = vmul.f32 %v2293, %v1745
    %v2770 = vmul.f32 %v2300, %v1746
    %v2771 = vmul.f32 %v2307, %v1747
    %v2772 = vmul.f32 %v2314, %v1748
    %v2773 = vmul.f32 %v2321, %v1749
    %v2774 = vmul.f32 %v2328, %v1750
    %v2775 = vmul.f32 %v2335, %v1751
    %v2776 = vmul.f32 %v2342, %v1752
    %v2777 = vmul.f32 %v2349, %v1753
    %v2778 = vmul.f32 %v2356, %v1754
    %v2779 = vmul.f32 %v2363, %v1755
    %v2780 = vmul.f32 %v2370, %v1756
    %v2781 = vmul.f32 %v2377, %v1757
    %v2782 = vmul.f32 %v2384, %v1758
    %v2783 = vmul.f32 %v2391, %v1759
    %v2784 = vmul.f32 %v2398, %v1760
    %v2785 = vmul.f32 %v2405, %v1761
    %v2786 = vmul.f32 %v2412, %v1762
    %v2787 = vmul.f32 %v2419, %v1763
    %v2788 = vmul.f32 %v2426, %v1764
    %v2789 = vmul.f32 %v2433, %v1765
    %v2790 = vmul.f32 %v2440, %v1766
    %v2791 = vmul.f32 %v2447, %v1767
    %v2792 = vmul.f32 %v2454, %v1768
    %v2793 = vmul.f32 %v2461, %v1769
    %v2794 = vmul.f32 %v2468, %v1770
    %v2795 = vmul.f32 %v2475, %v1771
    %v2796 = vmul.f32 %v2482, %v1772
    %v2797 = vmul.f32 %v2489, %v1773
    %v2798 = vmul.f32 %v2496, %v1774
    %v2799 = vmul.f32 %v2503, %v1775
    %v2800 = vmul.f32 %v2510, %v1776
    %v2801 = vmul.f32 %v2517, %v1777
    %v2802 = vmul.f32 %v2524, %v1778
    %v2803 = vmul.f32 %v2531, %v1779
    %v2804 = vmul.f32 %v2538, %v1780
    %v2805 = vmul.f32 %v2545, %v1781
    %v2806 = vmul.f32 %v2552, %v1782
    %v2807 = vmul.f32 %v2559, %v1783
    %v2808 = vmul.f32 %v2566, %v1784
    %v2809 = vmul.f32 %v2573, %v1785
    %v2810 = vmul.f32 %v2580, %v1786
    %v2811 = vmul.f32 %v2587, %v1787
    %v2812 = vmul.f32 %v2594, %v1788
    %v2813 = vmul.f32 %v2601, %v1789
    %v2814 = vmul.f32 %v2608, %v1790
    %v2815 = vmul.f32 %v2615, %v1791
    %v2816 = vmul.f32 %v2622, %v1792
    %v2817 = vmul.f32 %v2629, %v1793
    %v2818 = vmul.f32 %v2636, %v1794
    %v2819 = vmul.f32 %v2643, %v1795
    %v2820 = vmul.f32 %v2650, %v1796
    %v2821 = vmul.f32 %v2657, %v1797
    %v2822 = vmul.f32 %v2664, %v1798
    %v2823 = vmul.f32 %v2671, %v1799
    %v2824 = vmul.f32 %v2678, %v1800
    %v2825 = vmul.f32 %v2685, %v1801
    %v2826 = vmul.f32 %v2692, %v1802
    %v2827 = vmul.f32 %v2699, %v1803
    %v2828 = vadd.f32 %v2700, %v2701
    %v2829 = vadd.f32 %v2828, %v2702
    %v2830 = vadd.f32 %v2829, %v2703
    %v2831 = vadd.f32 %v2830, %v2704
    %v2832 = vadd.f32 %v2831, %v2705
    %v2833 = vadd.f32 %v2832, %v2706
    %v2834 = vadd.f32 %v2833, %v2707
    %v2835 = vadd.f32 %v2834, %v2708
    %v2836 = vadd.f32 %v2835, %v2709
    %v2837 = vadd.f32 %v2836, %v2710
    %v2838 = vadd.f32 %v2837, %v2711
    %v2839 = vadd.f32 %v2838, %v2712
    %v2840 = vadd.f32 %v2839, %v2713
    %v2841 = vadd.f32 %v2840, %v2714
    %v2842 = vadd.f32 %v2841, %v2715
    %v2843 = vadd.f32 %v2842, %v2716
    %v2844 = vadd.f32 %v2843, %v2717
    %v2845 = vadd.f32 %v2844, %v2718
    %v2846 = vadd.f32 %v2845, %v2719
    %v2847 = vadd.f32 %v2846, %v2720
    %v2848 = vadd.f32 %v2847, %v2721
    %v2849 = vadd.f32 %v2848, %v2722
    %v2850 = vadd.f32 %v2849, %v2723
    %v2851 = vadd.f32 %v2850, %v2724
    %v2852 = vadd.f32 %v2851, %v2725
    %v2853 = vadd.f32 %v2852, %v2726
    %v2854 = vadd.f32 %v2853, %v2727
    %v2855 = vadd.f32 %v2854, %v2728
    %v2856 = vadd.f32 %v2855, %v2729
    %v2857 = vadd.f32 %v2856, %v2730
    %v2858 = vadd.f32 %v2857, %v2731
    %v2859 = vadd.f32 %v2858, %v2732
    %v2860 = vadd.f32 %v2859, %v2733
    %v2861 = vadd.f32 %v2860, %v2734
    %v2862 = vadd.f32 %v2861, %v2735
    %v2863 = vadd.f32 %v2862, %v2736
    %v2864 = vadd.f32 %v2863, %v2737
    %v2865 = vadd.f32 %v2864, %v2738
    %v2866 = vadd.f32 %v2865, %v2739
    %v2867 = vadd.f32 %v2866, %v2740
    %v2868 = vadd.f32 %v2867, %v2741
    %v2869 = vadd.f32 %v2868, %v2742
    %v2870 = vadd.f32 %v2869, %v2743
    %v2871 = vadd.f32 %v2870, %v2744
    %v2872 = vadd.f32 %v2871, %v2745
    %v2873 = vadd.f32 %v2872, %v2746
    %v2874 = vadd.f32 %v2873, %v2747
    %v2875 = vadd.f32 %v2874, %v2748
    %v2876 = vadd.f32 %v2875, %v2749
    %v2877 = vadd.f32 %v2876, %v2750
    %v2878 = vadd.f32 %v2877, %v2751
    %v2879 = vadd.f32 %v2878, %v2752
    %v2880 = vadd.f32 %v2879, %v2753
    %v2881 = vadd.f32 %v2880, %v2754
    %v2882 = vadd.f32 %v2881, %v2755
    %v2883 = vadd.f32 %v2882, %v2756
    %v2884 = vadd.f32 %v2883, %v2757
    %v2885 = vadd.f32 %v2884, %v2758
    %v2886 = vadd.f32 %v2885, %v2759
    %v2887 = vadd.f32 %v2886, %v2760
    %v2888 = vadd.f32 %v2887, %v2761
    %v2889 = vadd.f32 %v2888, %v2762
    %v2890 = vadd.f32 %v2889, %v2763
    %v2891 = vadd.f32 %v2890, %v2764
    %v2892 = vadd.f32 %v2891, %v2765
    %v2893 = vadd.f32 %v2892, %v2766
    %v2894 = vadd.f32 %v2893, %v2767
    %v2895 = vadd.f32 %v2894, %v2768
    %v2896 = vadd.f32 %v2895, %v2769
    %v2897 = vadd.f32 %v2896, %v2770
    %v2898 = vadd.f32 %v2897, %v2771
    %v2899 = vadd.f32 %v2898, %v2772
    %v2900 = vadd.f32 %v2899, %v2773
    %v2901 = vadd.f32 %v2900, %v2774
    %v2902 = vadd.f32 %v2901, %v2775
    %v2903 = vadd.f32 %v2902, %v2776
    %v2904 = vadd.f32 %v2903, %v2777
    %v2905 = vadd.f32 %v2904, %v2778
    %v2906 = vadd.f32 %v2905, %v2779
    %v2907 = vadd.f32 %v2906, %v2780
    %v2908 = vadd.f32 %v2907, %v2781
    %v2909 = vadd.f32 %v2908, %v2782
    %v2910 = vadd.f32 %v2909, %v2783
    %v2911 = vadd.f32 %v2910, %v2784
    %v2912 = vadd.f32 %v2911, %v2785
    %v2913 = vadd.f32 %v2912, %v2786
    %v2914 = vadd.f32 %v2913, %v2787
    %v2915 = vadd.f32 %v2914, %v2788
    %v2916 = vadd.f32 %v2915, %v2789
    %v2917 = vadd.f32 %v2916, %v2790
    %v2918 = vadd.f32 %v2917, %v2791
    %v2919 = vadd.f32 %v2918, %v2792
    %v2920 = vadd.f32 %v2919, %v2793
    %v2921 = vadd.f32 %v2920, %v2794
    %v2922 = vadd.f32 %v2921, %v2795
    %v2923 = vadd.f32 %v2922, %v2796
    %v2924 = vadd.f32 %v2923, %v2797
    %v2925 = vadd.f32 %v2924, %v2798
    %v2926 = vadd.f32 %v2925, %v2799
    %v2927 = vadd.f32 %v2926, %v2800
    %v2928 = vadd.f32 %v2927, %v2801
    %v2929 = vadd.f32 %v2928, %v2802
    %v2930 = vadd.f32 %v2929, %v2803
    %v2931 = vadd.f32 %v2930, %v2804
    %v2932 = vadd.f32 %v2931, %v2805
    %v2933 = vadd.f32 %v2932, %v2806
    %v2934 = vadd.f32 %v2933, %v2807
    %v2935 = vadd.f32 %v2934, %v2808
    %v2936 = vadd.f32 %v2935, %v2809
    %v2937 = vadd.f32 %v2936, %v2810
    %v2938 = vadd.f32 %v2937, %v2811
    %v2939 = vadd.f32 %v2938, %v2812
    %v2940 = vadd.f32 %v2939, %v2813
    %v2941 = vadd.f32 %v2940, %v2814
    %v2942 = vadd.f32 %v2941, %v2815
    %v2943 = vadd.f32 %v2942, %v2816
    %v2944 = vadd.f32 %v2943, %v2817
    %v2945 = vadd.f32 %v2944, %v2818
    %v2946 = vadd.f32 %v2945, %v2819
    %v2947 = vadd.f32 %v2946, %v2820
    %v2948 = vadd.f32 %v2947, %v2821
    %v2949 = vadd.f32 %v2948, %v2822
    %v2950 = vadd.f32 %v2949, %v2823
    %v2951 = vadd.f32 %v2950, %v2824
    %v2952 = vadd.f32 %v2951, %v2825
    %v2953 = vadd.f32 %v2952, %v2826
    %v2954 = vadd.f32 %v2953, %v2827
    %v2955 = vld [vmem:[#allocation4] sm:$0xff]
    %2957 = vset.pattern.permute.xlu0 0
    %2958 = vperm.xlu0 %2957, %v1591
    %v2959 = vpop.permute.xlu0 %2958
    %v2961 = vmul.f32 %v2955, %v2959
    %v2962 = vadd.f32 %v2961, %v2954
    %2963 = vst [vmem:[#allocation4] sm:$0xff] %v2962
    %vm2964 = vcmask 7168
    %2965 = vst.msk [vmem:[#allocation3] sm:$0xff] %vm2964, %v1588
    // Predicated region
    $region30: #{tpu_custom_call.1} parent=1 // pred_check
      %p2966 = pneg %p57
    $region31: #{tpu_custom_call.1} parent=1 // pred_check_branch
      %2968 = sbr.rel (%p2966) target = $region33
    $region32: #{tpu_custom_call.1} parent=1 // pred_region
      %v2969 = vld [vmem:[#allocation3] sm:$0xff]
      %v2970 = vld [vmem:[#allocation2] sm:$0xff]
      %2972 = vset.pattern.permute.xlu0 0
      %2973 = vperm.xlu0 %2972, %v2969
      %v2974 = vpop.permute.xlu0 %2973
      %v2976 = vsub.f32 %v2970, %v2974
      %v2977 = vmul.f32 %v2976, 1.442695
      %v2978 = vpow.pop %v2977
      %2979 = vadd.xlane.f32.xlu0 %v2978
      %v2980 = vpop.xlane.xlu0 %2979
      %v2981 = vrcp.pop %v2980
      %v2982 = vmul.f32 %v2978, %v2981
      %2983 = vst [vmem:[#allocation11] sm:$0xff] %v2982
      %v2984 = vld [vmem:[#allocation4] sm:$0xff]
      %v2985 = vmul.f32 %v2984, %v2981
      %2986 = vst [vmem:[#allocation12] sm:$0xff] %v2985
    $region33: #{tpu_custom_call.1} parent=1 // pred_fallthru
      _
    // Predicated region
    $region34: #{tpu_custom_call.1} parent=1 // pred_check
      _
    $region35: #{tpu_custom_call.1} parent=1 // pred_check_branch
      %2988 = sbr.rel (0) target = $region37
    $region36: #{tpu_custom_call.1} parent=1 // pred_region
      %s2990 = ssub.s32 128, 128
      %2991 = vsyncadd [#allocation7], %s2990
      %s2993 = sshll.u32 [#allocation11], 4
      %s2994 = int_to_ptr.vmem [resolvable:$true] %s2993
      %2996 = dma.vmem_to_hbm [thread:$0]  %s2994, 128, %s3, [#allocation7]
    $region37: #{tpu_custom_call.1} parent=1 // pred_fallthru
      _
    // Predicated region
    $region38: #{tpu_custom_call.1} parent=1 // pred_check
      _
    $region39: #{tpu_custom_call.1} parent=1 // pred_check_branch
      %2998 = sbr.rel (0) target = $region41
    $region40: #{tpu_custom_call.1} parent=1 // pred_region
      %s3000 = ssub.s32 128, 128
      %3001 = vsyncadd [#allocation13], %s3000
      %s3003 = sshll.u32 [#allocation12], 4
      %s3004 = int_to_ptr.vmem [resolvable:$true] %s3003
      %3006 = dma.vmem_to_hbm [thread:$0]  %s3004, 128, %s4, [#allocation13]
    $region41: #{tpu_custom_call.1} parent=1 // pred_fallthru
      _
    // Predicated region
    $region42: #{tpu_custom_call.1} parent=1 // pred_check
      _
    $region43: #{tpu_custom_call.1} parent=1 // pred_check_branch
      %3008 = sbr.rel (0) target = $region45
    $region44: #{tpu_custom_call.1} parent=1 // pred_region
      %3009 = dma.done [#allocation7], 128
    $region45: #{tpu_custom_call.1} parent=1 // pred_fallthru
      _
    // Predicated region
    $region46: #{tpu_custom_call.1} parent=1 // pred_check
      _
    $region47: #{tpu_custom_call.1} parent=1 // pred_check_branch
      %3011 = sbr.rel (0) target = $region49
    $region48: #{tpu_custom_call.1} parent=1 // pred_region
      %3012 = dma.done [#allocation13], 128
    $region49: #{tpu_custom_call.1} parent=1 // pred_fallthru
      _
    %3013 = vsyncpa [#allocation6], 1
    %3014 = vsyncpa [#allocation9], 1
    %3015 = vsyncpa [#allocation7], 1
    %3016 = vsyncpa [#allocation13], 1

</llo_original>
